<compile_context>
chip_gen: v6e
topology: v6e:2x2x1
jax: 0.10.0
libtpu: 0.0.40
codegen_flags: <defaults>
</compile_context>

<pallas_src>
import functools

import jax
import jax.numpy as jnp
from jax.experimental import pallas as pl
from jax.experimental.pallas import tpu as pltpu


def _mlp_kernel(x_ref, w1_ref, b1_ref, w2_ref, b2_ref, w3_ref, b3_ref, o_ref):
    """Fused 3-layer MLP: (Linear+ReLU) -> (Linear+ReLU) -> Linear.

    x / weights arrive as bf16 (full-rate MXU); accumulation, bias add and
    ReLU run in f32; the result is stored in the output dtype (f32).
    """
    x = x_ref[...]  # (block, in_dim) bf16

    h1 = jnp.dot(x, w1_ref[...], preferred_element_type=jnp.float32) + b1_ref[...]
    h1 = jnp.maximum(h1, 0.0).astype(jnp.bfloat16)

    h2 = jnp.dot(h1, w2_ref[...], preferred_element_type=jnp.float32) + b2_ref[...]
    h2 = jnp.maximum(h2, 0.0).astype(jnp.bfloat16)

    out = jnp.dot(h2, w3_ref[...], preferred_element_type=jnp.float32) + b3_ref[...]
    o_ref[...] = out.astype(o_ref.dtype)


def _round_up(n, m):
    return ((n + m - 1) // m) * m


@functools.partial(jax.jit, static_argnames=("block_b",))
def mlp_forward(x, w1, b1, w2, b2, w3, b3, *, block_b=512):
    """Run the fused MLP Pallas kernel.

    x:  (B, in_dim)   float32
    w1: (in_dim, h1)  b1: (1, h1)     (weights are torch W.T: in x out)
    w2: (h1, h2)      b2: (1, h2)
    w3: (h2, out)     b3: (1, out)
    returns (B, out) float32

    block_b: batch tile (multiple of 256 recommended: matches v6e/v7x 256-row
    MXU passes; any multiple of 8 is accepted). Ragged B and narrow out_dim
    are handled by zero-padding here and slicing after the kernel.
    """
    assert block_b % 8 == 0, "block_b must be a multiple of 8"
    B, in_dim = x.shape
    h1 = w1.shape[1]
    h2 = w2.shape[1]
    out_dim = w3.shape[1]

    # Batch tile: never bigger than the (8-rounded) batch itself.
    block = min(block_b, _round_up(B, 8))
    B_pad = _round_up(B, block)
    # Lane-dense output: pad out columns to a multiple of 128 (full-width vst).
    n_pad = _round_up(out_dim, 128)

    xp = x if B_pad == B else jnp.pad(x, ((0, B_pad - B), (0, 0)))
    w3p = w3 if n_pad == out_dim else jnp.pad(w3, ((0, 0), (0, n_pad - out_dim)))
    b3p = b3 if n_pad == out_dim else jnp.pad(b3, ((0, 0), (0, n_pad - out_dim)))

    # bf16 operands for the MXU (v5e/v6e/v7x all run bf16 at full rate with
    # f32 accumulation); biases stay f32 for the f32 epilogue.
    xp = xp.astype(jnp.bfloat16)
    w1b = w1.astype(jnp.bfloat16)
    w2b = w2.astype(jnp.bfloat16)
    w3b = w3p.astype(jnp.bfloat16)
    b1f = b1.astype(jnp.float32)
    b2f = b2.astype(jnp.float32)
    b3f = b3p.astype(jnp.float32)

    grid = (B_pad // block,)

    # Weights / biases are small -> full arrays resident in VMEM each step
    # (block == full array, so the (8,128) constraint is waived).
    def full(shape):
        return pl.BlockSpec(shape, lambda i: (0,) * len(shape))

    flops = 2 * B_pad * (in_dim * h1 + h1 * h2 + h2 * n_pad)
    bytes_accessed = (
        xp.size * 2                                   # bf16 activations in
        + (w1b.size + w2b.size + w3b.size) * 2        # bf16 weights
        + (b1f.size + b2f.size + b3f.size) * 4        # f32 biases
        + B_pad * n_pad * 4                           # f32 output
    )

    out = pl.pallas_call(
        _mlp_kernel,
        out_shape=jax.ShapeDtypeStruct((B_pad, n_pad), x.dtype),
        grid_spec=pltpu.PrefetchScalarGridSpec(
            num_scalar_prefetch=0,
            grid=grid,
            in_specs=[
                pl.BlockSpec((block, in_dim), lambda i: (i, 0)),  # x tile
                full((in_dim, h1)),
                full((1, h1)),
                full((h1, h2)),
                full((1, h2)),
                full((h2, n_pad)),
                full((1, n_pad)),
            ],
            out_specs=pl.BlockSpec((block, n_pad), lambda i: (i, 0)),
        ),
        compiler_params=pltpu.CompilerParams(
            dimension_semantics=("parallel",),        # batch tiles -> megacore
            vmem_limit_bytes=32 * 1024 * 1024,        # explicit, safe on 64 MiB v7x
        ),
        cost_estimate=pl.CostEstimate(
            flops=flops, transcendentals=0, bytes_accessed=bytes_accessed
        ),
    )(xp, w1b, b1f, w2b, b2f, w3b, b3f)

    return out[:B, :out_dim]


def init_mlp_params(key, in_dim, hidden_dim, out_dim):
    """Deterministic init mirroring the PyTorch module:
    - weights: xavier normal (std = sqrt(2 / (fan_in + fan_out)))
    - biases: torch.nn.Linear default, U(-1/sqrt(fan_in), 1/sqrt(fan_in))
    Weights are stored as (in_features, out_features) = W.T of the torch layout.
    """
    dims = [in_dim] + list(hidden_dim) + [out_dim]
    params = []
    for fan_in, fan_out in zip(dims[:-1], dims[1:]):
        key, kw, kb = jax.random.split(key, 3)
        std = (2.0 / (fan_in + fan_out)) ** 0.5
        w = std * jax.random.normal(kw, (fan_in, fan_out), dtype=jnp.float32)
        bound = 1.0 / (fan_in ** 0.5)
        b = jax.random.uniform(
            kb, (1, fan_out), dtype=jnp.float32, minval=-bound, maxval=bound
        )
        params.extend([w, b])
    return params


def mlp_reference(x, w1, b1, w2, b2, w3, b3):
    h = jnp.maximum(x @ w1 + b1, 0.0)
    h = jnp.maximum(h @ w2 + b2, 0.0)
    return h @ w3 + b3  # dropout in eval mode == identity


if __name__ == "__main__":
    # MLP(in_dim=32, hidden_dim=[64, 64], out_dim=16); batch chosen so the
    # default block_b=512 gives a ragged, multi-step parallel grid (grid=(2,)).
    batch, in_dim, hidden_dim, out_dim = 1000, 32, [64, 64], 16

    key = jax.random.PRNGKey(0)
    key, kx = jax.random.split(key)
    x = jax.random.normal(kx, (batch, in_dim), dtype=jnp.float32)

    w1, b1, w2, b2, w3, b3 = init_mlp_params(key, in_dim, hidden_dim, out_dim)

    out = mlp_forward(x, w1, b1, w2, b2, w3, b3)  # default block_b=512
    out = jax.block_until_ready(out)

    ref = mlp_reference(x, w1, b1, w2, b2, w3, b3)
    assert out.shape == (batch, out_dim)
    # bf16 matmul operands with f32 accumulation -> small tolerance vs f32 ref.
    assert jnp.allclose(out, ref, atol=3e-2, rtol=3e-2), "mismatch vs reference"

    print("KERNEL_OK")
</pallas_src>

<mosaic_0001>
module attributes {stable_mosaic.version = 11 : i64} {
  func.func @_mlp_kernel(%arg0: i32, %arg1: memref<512x32xbf16, #tpu.memory_space<vmem>>, %arg2: memref<32x64xbf16, #tpu.memory_space<vmem>>, %arg3: memref<1x64xf32, #tpu.memory_space<vmem>>, %arg4: memref<64x64xbf16, #tpu.memory_space<vmem>>, %arg5: memref<1x64xf32, #tpu.memory_space<vmem>>, %arg6: memref<64x128xbf16, #tpu.memory_space<vmem>>, %arg7: memref<1x128xf32, #tpu.memory_space<vmem>>, %arg8: memref<512x128xf32, #tpu.memory_space<vmem>>) attributes {dimension_semantics = [#tpu.dimension_semantics<parallel>], iteration_bounds = array<i64: 2>, scalar_prefetch = 0 : i64, scratch_operands = 0 : i64, tpu.core_type = #tpu.core_type<tc>, window_params = [{transform_indices = @transform_0, window_bounds = array<i64: 512, 32>}, {pipeline_mode = #tpu.pipeline_mode<synchronous>, transform_indices = @transform_1, window_bounds = array<i64: 32, 64>}, {pipeline_mode = #tpu.pipeline_mode<synchronous>, transform_indices = @transform_2, window_bounds = array<i64: 1, 64>}, {pipeline_mode = #tpu.pipeline_mode<synchronous>, transform_indices = @transform_3, window_bounds = array<i64: 64, 64>}, {pipeline_mode = #tpu.pipeline_mode<synchronous>, transform_indices = @transform_4, window_bounds = array<i64: 1, 64>}, {pipeline_mode = #tpu.pipeline_mode<synchronous>, transform_indices = @transform_5, window_bounds = array<i64: 64, 128>}, {pipeline_mode = #tpu.pipeline_mode<synchronous>, transform_indices = @transform_6, window_bounds = array<i64: 1, 128>}, {transform_indices = @transform_7, window_bounds = array<i64: 512, 128>}]} {
    %c0 = arith.constant 0 : index
    %c0_0 = arith.constant 0 : index
    %0 = vector.load %arg1[%c0, %c0_0] : memref<512x32xbf16, #tpu.memory_space<vmem>>, vector<512x32xbf16>
    %c0_1 = arith.constant 0 : index
    %c0_2 = arith.constant 0 : index
    %1 = vector.load %arg2[%c0_1, %c0_2] : memref<32x64xbf16, #tpu.memory_space<vmem>>, vector<32x64xbf16>
    %cst = arith.constant dense<0.000000e+00> : vector<512x64xf32>
    %2 = tpu.matmul %0, %1, %cst {dimension_numbers = #tpu.dot_dimension_numbers<[1], [0], [0], [1], [0, 0, 1, 1], [], []>} : vector<512x32xbf16>, vector<32x64xbf16>, vector<512x64xf32> -> vector<512x64xf32>
    %c0_3 = arith.constant 0 : index
    %c0_4 = arith.constant 0 : index
    %3 = vector.load %arg3[%c0_3, %c0_4] : memref<1x64xf32, #tpu.memory_space<vmem>>, vector<1x64xf32>
    %4 = vector.broadcast %3 : vector<1x64xf32> to vector<512x64xf32>
    %5 = arith.addf %2, %4 : vector<512x64xf32>
    %cst_5 = arith.constant 0.000000e+00 : f32
    %6 = vector.broadcast %cst_5 : f32 to vector<512x64xf32>
    %7 = arith.maximumf %5, %6 : vector<512x64xf32>
    %8 = arith.truncf %7 : vector<512x64xf32> to vector<512x64xbf16>
    %c0_6 = arith.constant 0 : index
    %c0_7 = arith.constant 0 : index
    %9 = vector.load %arg4[%c0_6, %c0_7] : memref<64x64xbf16, #tpu.memory_space<vmem>>, vector<64x64xbf16>
    %cst_8 = arith.constant dense<0.000000e+00> : vector<512x64xf32>
    %10 = tpu.matmul %8, %9, %cst_8 {dimension_numbers = #tpu.dot_dimension_numbers<[1], [0], [0], [1], [0, 0, 1, 1], [], []>} : vector<512x64xbf16>, vector<64x64xbf16>, vector<512x64xf32> -> vector<512x64xf32>
    %c0_9 = arith.constant 0 : index
    %c0_10 = arith.constant 0 : index
    %11 = vector.load %arg5[%c0_9, %c0_10] : memref<1x64xf32, #tpu.memory_space<vmem>>, vector<1x64xf32>
    %12 = vector.broadcast %11 : vector<1x64xf32> to vector<512x64xf32>
    %13 = arith.addf %10, %12 : vector<512x64xf32>
    %cst_11 = arith.constant 0.000000e+00 : f32
    %14 = vector.broadcast %cst_11 : f32 to vector<512x64xf32>
    %15 = arith.maximumf %13, %14 : vector<512x64xf32>
    %16 = arith.truncf %15 : vector<512x64xf32> to vector<512x64xbf16>
    %c0_12 = arith.constant 0 : index
    %c0_13 = arith.constant 0 : index
    %17 = vector.load %arg6[%c0_12, %c0_13] : memref<64x128xbf16, #tpu.memory_space<vmem>>, vector<64x128xbf16>
    %cst_14 = arith.constant dense<0.000000e+00> : vector<512x128xf32>
    %18 = tpu.matmul %16, %17, %cst_14 {dimension_numbers = #tpu.dot_dimension_numbers<[1], [0], [0], [1], [0, 0, 1, 1], [], []>} : vector<512x64xbf16>, vector<64x128xbf16>, vector<512x128xf32> -> vector<512x128xf32>
    %c0_15 = arith.constant 0 : index
    %c0_16 = arith.constant 0 : index
    %19 = vector.load %arg7[%c0_15, %c0_16] : memref<1x128xf32, #tpu.memory_space<vmem>>, vector<1x128xf32>
    %20 = vector.broadcast %19 : vector<1x128xf32> to vector<512x128xf32>
    %21 = arith.addf %18, %20 : vector<512x128xf32>
    %c0_17 = arith.constant 0 : index
    %c0_18 = arith.constant 0 : index
    %22 = vector.load %arg8[%c0_17, %c0_18] : memref<512x128xf32, #tpu.memory_space<vmem>>, vector<512x128xf32>
    tpu.vector_store %arg8[%c0_17, %c0_18], %21 {strides = array<i32>} : memref<512x128xf32, #tpu.memory_space<vmem>>, vector<512x128xf32>,
    return
  }
  func.func @transform_0(%arg0: i32) -> (i32, i32) {
    %c0_i32 = arith.constant 0 : i32
    %c0_i32_0 = arith.constant 0 : i32
    return %arg0, %c0_i32 : i32, i32
  }
  func.func @transform_1(%arg0: i32) -> (i32, i32) {
    %c0_i32 = arith.constant 0 : i32
    %c0_i32_0 = arith.constant 0 : i32
    %c0_i32_1 = arith.constant 0 : i32
    return %c0_i32, %c0_i32_0 : i32, i32
  }
  func.func @transform_2(%arg0: i32) -> (i32, i32) {
    %c0_i32 = arith.constant 0 : i32
    %c0_i32_0 = arith.constant 0 : i32
    %c0_i32_1 = arith.constant 0 : i32
    return %c0_i32, %c0_i32_0 : i32, i32
  }
  func.func @transform_3(%arg0: i32) -> (i32, i32) {
    %c0_i32 = arith.constant 0 : i32
    %c0_i32_0 = arith.constant 0 : i32
    %c0_i32_1 = arith.constant 0 : i32
    return %c0_i32, %c0_i32_0 : i32, i32
  }
  func.func @transform_4(%arg0: i32) -> (i32, i32) {
    %c0_i32 = arith.constant 0 : i32
    %c0_i32_0 = arith.constant 0 : i32
    %c0_i32_1 = arith.constant 0 : i32
    return %c0_i32, %c0_i32_0 : i32, i32
  }
  func.func @transform_5(%arg0: i32) -> (i32, i32) {
    %c0_i32 = arith.constant 0 : i32
    %c0_i32_0 = arith.constant 0 : i32
    %c0_i32_1 = arith.constant 0 : i32
    return %c0_i32, %c0_i32_0 : i32, i32
  }
  func.func @transform_6(%arg0: i32) -> (i32, i32) {
    %c0_i32 = arith.constant 0 : i32
    %c0_i32_0 = arith.constant 0 : i32
    %c0_i32_1 = arith.constant 0 : i32
    return %c0_i32, %c0_i32_0 : i32, i32
  }
  func.func @transform_7(%arg0: i32) -> (i32, i32) {
    %c0_i32 = arith.constant 0 : i32
    %c0_i32_0 = arith.constant 0 : i32
    return %arg0, %c0_i32 : i32, i32
  }
}

</mosaic_0001>

<llo_original>
// kernel: mlp_forward.1
$region0: #{mlp_forward.1}
  #allocation0 [shape = 'u32[]', space=smem, size = 0x4, offset = 0x4, fixed_abs, tag = 'smem constant byte address 0x4 - core index']
  #allocation1 [shape = 'u32[144,128]{1,0:T(1,128)}', space=vmem, size = 0x12000, scoped, tag = 'internal scratch']
  %s0 = inlined_call_operand.vmem [shape: bf16[1024,32], index: 0, kind: input, shape index: {}]
  %s1 = inlined_call_operand.vmem [shape: bf16[32,64], index: 1, kind: input, shape index: {}]
  %s2 = inlined_call_operand.vmem [shape: f32[1,64], index: 2, kind: input, shape index: {}]
  %s3 = inlined_call_operand.vmem [shape: bf16[64,64], index: 3, kind: input, shape index: {}]
  %s4 = inlined_call_operand.vmem [shape: f32[1,64], index: 4, kind: input, shape index: {}]
  %s5 = inlined_call_operand.vmem [shape: bf16[64,128], index: 5, kind: input, shape index: {}]
  %s6 = inlined_call_operand.vmem [shape: f32[1,128], index: 6, kind: input, shape index: {}]
  %s7 = inlined_call_operand.vmem [shape: f32[1024,128], index: 7, kind: output, shape index: {}]
  %s8 = sld [smem:[#allocation0]]
  $region61: #{mlp_forward.1} parent=0
    _
  %s10 = ssub.s32 1, %s8
  %s11 = scalar_select 0, %s10, %s8
  loop: start=0, step=1, limit=4
  $region2: #{mlp_forward.1} parent=0 // loop_pre_header
    _
  $region3: #{mlp_forward.1} parent=0 // loop_header
    %s13 = sphi 0, %s17
    %p14 = scmp.ge.s32.totalorder %s13, 4
    %s23 = sphi 0, %s25
    %s26 = sphi 0, %s23
    %s27 = sphi 0, %s26
    %s43 = sphi 0, %s27
    %s47 = sphi 0, %s47
    %s49 = sphi 0, %s47
    %s50 = sphi 0, %s49
    %s64 = sphi 0, %s50
    %s68 = sphi 0, %s68
    %s70 = sphi 0, %s68
    %s71 = sphi 0, %s70
    %s85 = sphi 0, %s71
    %s89 = sphi 0, %s89
    %s91 = sphi 0, %s89
    %s92 = sphi 0, %s91
    %s106 = sphi 0, %s92
    %s110 = sphi 0, %s110
    %s112 = sphi 0, %s110
    %s113 = sphi 0, %s112
    %s127 = sphi 0, %s113
    %s131 = sphi 0, %s131
    %s133 = sphi 0, %s131
    %s134 = sphi 0, %s133
    %s148 = sphi 0, %s134
    %s152 = sphi 0, %s152
    %s154 = sphi 0, %s152
    %s155 = sphi 0, %s154
    %s169 = sphi 0, %s155
    %s175 = sphi 0, %s177
    %s178 = sphi 0, %s175
    %s179 = sphi 0, %s178
    %s195 = sphi 0, %s179
  $region4: #{mlp_forward.1} parent=0 // loop_header_branch
    %16 = sbr.rel (%p14) target = $region8
  $region5: #{mlp_forward.1} parent=0 // loop_body
    %s18 = ssub.s32 %s13, 1
    %s19 = ssub.s32 %s13, 2
    %s20 = sadd.s32 %s13, 1
    %s21 = ssub.s32 %s13, %s20
    %p22 = scmp.eq.s32.totalorder %s21, 0
    %s24 = sadd.s32 %s23, 1
    %s25 = scalar_select %p22, %s23, %s24
    %p28 = pneg %p22
    %p29 = scmp.eq.s32.totalorder %s13, 1
    %p30 = por %p28, %p29
    %p31 = scmp.ne.s32.totalorder %s23, %s26
    %p32 = scmp.eq.s32.totalorder %s13, 0
    %p33 = por %p31, %p32
    %p34 = scmp.ne.s32.totalorder %s23, %s26
    %p35 = scmp.eq.s32.totalorder %s18, 1
    %p36 = por %p34, %p35
    %p37 = scmp.ne.s32.totalorder %s26, %s27
    %p38 = scmp.eq.s32.totalorder %s18, 0
    %p39 = por %p37, %p38
    %p40 = scmp.ne.s32.totalorder %s26, %s27
    %p41 = scmp.eq.s32.totalorder %s19, 1
    %p42 = por %p40, %p41
    %p44 = scmp.ne.s32.totalorder %s27, %s43
    %p45 = scmp.eq.s32.totalorder %s19, 0
    %p46 = por %p44, %p45
    %s48 = sadd.s32 %s47, 1
    %p51 = scmp.eq.s32.totalorder %s13, 1
    %p52 = scmp.ne.s32.totalorder %s47, %s49
    %p53 = scmp.eq.s32.totalorder %s13, 0
    %p54 = por %p52, %p53
    %p55 = scmp.ne.s32.totalorder %s47, %s49
    %p56 = scmp.eq.s32.totalorder %s18, 1
    %p57 = por %p55, %p56
    %p58 = scmp.ne.s32.totalorder %s49, %s50
    %p59 = scmp.eq.s32.totalorder %s18, 0
    %p60 = por %p58, %p59
    %p61 = scmp.ne.s32.totalorder %s49, %s50
    %p62 = scmp.eq.s32.totalorder %s19, 1
    %p63 = por %p61, %p62
    %p65 = scmp.ne.s32.totalorder %s50, %s64
    %p66 = scmp.eq.s32.totalorder %s19, 0
    %p67 = por %p65, %p66
    %s69 = sadd.s32 %s68, 1
    %p72 = scmp.eq.s32.totalorder %s13, 1
    %p73 = scmp.ne.s32.totalorder %s68, %s70
    %p74 = scmp.eq.s32.totalorder %s13, 0
    %p75 = por %p73, %p74
    %p76 = scmp.ne.s32.totalorder %s68, %s70
    %p77 = scmp.eq.s32.totalorder %s18, 1
    %p78 = por %p76, %p77
    %p79 = scmp.ne.s32.totalorder %s70, %s71
    %p80 = scmp.eq.s32.totalorder %s18, 0
    %p81 = por %p79, %p80
    %p82 = scmp.ne.s32.totalorder %s70, %s71
    %p83 = scmp.eq.s32.totalorder %s19, 1
    %p84 = por %p82, %p83
    %p86 = scmp.ne.s32.totalorder %s71, %s85
    %p87 = scmp.eq.s32.totalorder %s19, 0
    %p88 = por %p86, %p87
    %s90 = sadd.s32 %s89, 1
    %p93 = scmp.eq.s32.totalorder %s13, 1
    %p94 = scmp.ne.s32.totalorder %s89, %s91
    %p95 = scmp.eq.s32.totalorder %s13, 0
    %p96 = por %p94, %p95
    %p97 = scmp.ne.s32.totalorder %s89, %s91
    %p98 = scmp.eq.s32.totalorder %s18, 1
    %p99 = por %p97, %p98
    %p100 = scmp.ne.s32.totalorder %s91, %s92
    %p101 = scmp.eq.s32.totalorder %s18, 0
    %p102 = por %p100, %p101
    %p103 = scmp.ne.s32.totalorder %s91, %s92
    %p104 = scmp.eq.s32.totalorder %s19, 1
    %p105 = por %p103, %p104
    %p107 = scmp.ne.s32.totalorder %s92, %s106
    %p108 = scmp.eq.s32.totalorder %s19, 0
    %p109 = por %p107, %p108
    %s111 = sadd.s32 %s110, 1
    %p114 = scmp.eq.s32.totalorder %s13, 1
    %p115 = scmp.ne.s32.totalorder %s110, %s112
    %p116 = scmp.eq.s32.totalorder %s13, 0
    %p117 = por %p115, %p116
    %p118 = scmp.ne.s32.totalorder %s110, %s112
    %p119 = scmp.eq.s32.totalorder %s18, 1
    %p120 = por %p118, %p119
    %p121 = scmp.ne.s32.totalorder %s112, %s113
    %p122 = scmp.eq.s32.totalorder %s18, 0
    %p123 = por %p121, %p122
    %p124 = scmp.ne.s32.totalorder %s112, %s113
    %p125 = scmp.eq.s32.totalorder %s19, 1
    %p126 = por %p124, %p125
    %p128 = scmp.ne.s32.totalorder %s113, %s127
    %p129 = scmp.eq.s32.totalorder %s19, 0
    %p130 = por %p128, %p129
    %s132 = sadd.s32 %s131, 1
    %p135 = scmp.eq.s32.totalorder %s13, 1
    %p136 = scmp.ne.s32.totalorder %s131, %s133
    %p137 = scmp.eq.s32.totalorder %s13, 0
    %p138 = por %p136, %p137
    %p139 = scmp.ne.s32.totalorder %s131, %s133
    %p140 = scmp.eq.s32.totalorder %s18, 1
    %p141 = por %p139, %p140
    %p142 = scmp.ne.s32.totalorder %s133, %s134
    %p143 = scmp.eq.s32.totalorder %s18, 0
    %p144 = por %p142, %p143
    %p145 = scmp.ne.s32.totalorder %s133, %s134
    %p146 = scmp.eq.s32.totalorder %s19, 1
    %p147 = por %p145, %p146
    %p149 = scmp.ne.s32.totalorder %s134, %s148
    %p150 = scmp.eq.s32.totalorder %s19, 0
    %p151 = por %p149, %p150
    %s153 = sadd.s32 %s152, 1
    %p156 = scmp.eq.s32.totalorder %s13, 1
    %p157 = scmp.ne.s32.totalorder %s152, %s154
    %p158 = scmp.eq.s32.totalorder %s13, 0
    %p159 = por %p157, %p158
    %p160 = scmp.ne.s32.totalorder %s152, %s154
    %p161 = scmp.eq.s32.totalorder %s18, 1
    %p162 = por %p160, %p161
    %p163 = scmp.ne.s32.totalorder %s154, %s155
    %p164 = scmp.eq.s32.totalorder %s18, 0
    %p165 = por %p163, %p164
    %p166 = scmp.ne.s32.totalorder %s154, %s155
    %p167 = scmp.eq.s32.totalorder %s19, 1
    %p168 = por %p166, %p167
    %p170 = scmp.ne.s32.totalorder %s155, %s169
    %p171 = scmp.eq.s32.totalorder %s19, 0
    %p172 = por %p170, %p171
    %s173 = ssub.s32 %s13, %s20
    %p174 = scmp.eq.s32.totalorder %s173, 0
    %s176 = sadd.s32 %s175, 1
    %s177 = scalar_select %p174, %s175, %s176
    %p180 = pneg %p174
    %p181 = scmp.eq.s32.totalorder %s13, 1
    %p182 = por %p180, %p181
    %p183 = scmp.ne.s32.totalorder %s175, %s178
    %p184 = scmp.eq.s32.totalorder %s13, 0
    %p185 = por %p183, %p184
    %p186 = scmp.ne.s32.totalorder %s175, %s178
    %p187 = scmp.eq.s32.totalorder %s18, 1
    %p188 = por %p186, %p187
    %p189 = scmp.ne.s32.totalorder %s178, %s179
    %p190 = scmp.eq.s32.totalorder %s18, 0
    %p191 = por %p189, %p190
    %p192 = scmp.ne.s32.totalorder %s178, %s179
    %p193 = scmp.eq.s32.totalorder %s19, 1
    %p194 = por %p192, %p193
    %p196 = scmp.ne.s32.totalorder %s179, %s195
    %p197 = scmp.eq.s32.totalorder %s19, 0
    %p198 = por %p196, %p197
    %p199 = scmp.le.s32.totalorder 1, %s13
    %p200 = scmp.lt.s32.totalorder %s13, 3
    %p201 = pnand %p199, %p200
    %p202 = pneg %p201
    // Predicated region
    $region9: #{mlp_forward.1} parent=5 // pred_check
      _
    $region10: #{mlp_forward.1} parent=5 // pred_check_branch
      %204 = sbr.rel (%p201) target = $region12
    $region11: #{mlp_forward.1} parent=5 // pred_region
      %s205 = ssub.s32 %s13, 1
      // Predicated region
      $region13: #{mlp_forward.1} parent=11 // pred_check
        %p206 = pneg %p60
      $region14: #{mlp_forward.1} parent=11 // pred_check_branch
        %208 = sbr.rel (%p206) target = $region16
      $region15: #{mlp_forward.1} parent=11 // pred_region
        _
      $region16: #{mlp_forward.1} parent=11 // pred_fallthru
        _
      // Predicated region
      $region17: #{mlp_forward.1} parent=11 // pred_check
        %p209 = pneg %p81
      $region18: #{mlp_forward.1} parent=11 // pred_check_branch
        %211 = sbr.rel (%p209) target = $region20
      $region19: #{mlp_forward.1} parent=11 // pred_region
        _
      $region20: #{mlp_forward.1} parent=11 // pred_fallthru
        _
      // Predicated region
      $region21: #{mlp_forward.1} parent=11 // pred_check
        %p212 = pneg %p102
      $region22: #{mlp_forward.1} parent=11 // pred_check_branch
        %214 = sbr.rel (%p212) target = $region24
      $region23: #{mlp_forward.1} parent=11 // pred_region
        _
      $region24: #{mlp_forward.1} parent=11 // pred_fallthru
        _
      // Predicated region
      $region25: #{mlp_forward.1} parent=11 // pred_check
        %p215 = pneg %p123
      $region26: #{mlp_forward.1} parent=11 // pred_check_branch
        %217 = sbr.rel (%p215) target = $region28
      $region27: #{mlp_forward.1} parent=11 // pred_region
        _
      $region28: #{mlp_forward.1} parent=11 // pred_fallthru
        _
      // Predicated region
      $region29: #{mlp_forward.1} parent=11 // pred_check
        %p218 = pneg %p144
      $region30: #{mlp_forward.1} parent=11 // pred_check_branch
        %220 = sbr.rel (%p218) target = $region32
      $region31: #{mlp_forward.1} parent=11 // pred_region
        _
      $region32: #{mlp_forward.1} parent=11 // pred_fallthru
        _
      // Predicated region
      $region33: #{mlp_forward.1} parent=11 // pred_check
        %p221 = pneg %p165
      $region34: #{mlp_forward.1} parent=11 // pred_check_branch
        %223 = sbr.rel (%p221) target = $region36
      $region35: #{mlp_forward.1} parent=11 // pred_region
        _
      $region36: #{mlp_forward.1} parent=11 // pred_fallthru
        _
    $region12: #{mlp_forward.1} parent=5 // pred_fallthru
      _
    %p224 = scmp.lt.s32.totalorder %s13, 2
    // Predicated region
    $region37: #{mlp_forward.1} parent=5 // pred_check
      %p225 = pneg %p224
    $region38: #{mlp_forward.1} parent=5 // pred_check_branch
      %227 = sbr.rel (%p225) target = $region40
    $region39: #{mlp_forward.1} parent=5 // pred_region
      // Predicated region
      $region41: #{mlp_forward.1} parent=39 // pred_check
        %p228 = pneg %p33
      $region42: #{mlp_forward.1} parent=39 // pred_check_branch
        %230 = sbr.rel (%p228) target = $region44
      $region43: #{mlp_forward.1} parent=39 // pred_region
        %s231 = smul.u32 64, %s13
        %p232 = scmp.lt.s32.totalorder %s231, 127
        %s233 = scalar_select %p232, %s231, 127
        %s234 = smul.addr %s233, 4
        %s235 = scalar_lea.vmem %s0, %s234
        %s236 = smul.u32 64, %s13
      $region44: #{mlp_forward.1} parent=39 // pred_fallthru
        _
    $region40: #{mlp_forward.1} parent=5 // pred_fallthru
      _
    %p237 = scmp.le.s32.totalorder 1, %s13
    %p238 = scmp.lt.s32.totalorder %s13, 3
    %p239 = pnand %p237, %p238
    %p240 = pneg %p239
    // Predicated region
    $region45: #{mlp_forward.1} parent=5 // pred_check
      _
    $region46: #{mlp_forward.1} parent=5 // pred_check_branch
      %242 = sbr.rel (%p239) target = $region48
    $region47: #{mlp_forward.1} parent=5 // pred_region
      %s243 = ssub.s32 %s13, 1
      %s244 = smul.u32 64, %s18
      %p245 = scmp.lt.s32.totalorder %s244, 127
      %s246 = scalar_select %p245, %s244, 127
      %s247 = smul.addr %s246, 4
      %s248 = scalar_lea.vmem %s0, %s247
      %p249 = pneg %p39
      %p250 = pneg %p36
      %p251 = pneg %p60
      %p252 = pneg %p57
      %p253 = pneg %p81
      %p254 = pneg %p78
      %p255 = pneg %p102
      %p256 = pneg %p99
      %p257 = pneg %p123
      %p258 = pneg %p120
      %p259 = pneg %p144
      %p260 = pneg %p141
      %p261 = pneg %p165
      %p262 = pneg %p162
      %p263 = pneg %p191
      %p264 = pneg %p188
      %s265 = smul.u32 64, %s18
      %p266 = scmp.lt.s32.totalorder %s265, 127
      %s267 = scalar_select %p266, %s265, 127
      %s268 = smul.addr %s267, 8
      %s269 = scalar_lea.vmem %s7, %s268
      %s270 = smul.u32 64, %s18
      %p271 = scmp.lt.s32.totalorder %s270, 127
      %s272 = scalar_select %p271, %s270, 127
      %s273 = smul.addr %s272, 4
      %s274 = scalar_lea.vmem %s0, %s273
      %s275 = smul.u32 64, %s18
      %s276 = smul.u32 64, %s18
      %p277 = scmp.lt.s32.totalorder %s276, 127
      %s278 = scalar_select %p277, %s276, 127
      %s279 = smul.addr %s278, 8
      %s280 = scalar_lea.vmem %s7, %s279
      %s281 = smul.u32 64, %s18
      %v283 = vld [vmem:[%s274] sm:$0xf]
      %v284 = vld [vmem:[%s274 + $0x4] sm:$0xf]
      %v285 = vld [vmem:[%s274 + $0x8] sm:$0xf]
      %v286 = vld [vmem:[%s274 + $0xc] sm:$0xf]
      %v287 = vld [vmem:[%s274 + $0x10] sm:$0xf]
      %v288 = vld [vmem:[%s274 + $0x14] sm:$0xf]
      %v289 = vld [vmem:[%s274 + $0x18] sm:$0xf]
      %v290 = vld [vmem:[%s274 + $0x1c] sm:$0xf]
      %v291 = vld [vmem:[%s274 + $0x20] sm:$0xf]
      %v292 = vld [vmem:[%s274 + $0x24] sm:$0xf]
      %v293 = vld [vmem:[%s274 + $0x28] sm:$0xf]
      %v294 = vld [vmem:[%s274 + $0x2c] sm:$0xf]
      %v295 = vld [vmem:[%s274 + $0x30] sm:$0xf]
      %v296 = vld [vmem:[%s274 + $0x34] sm:$0xf]
      %v297 = vld [vmem:[%s274 + $0x38] sm:$0xf]
      %v298 = vld [vmem:[%s274 + $0x3c] sm:$0xf]
      %v299 = vld [vmem:[%s274 + $0x40] sm:$0xf]
      %v300 = vld [vmem:[%s274 + $0x44] sm:$0xf]
      %v301 = vld [vmem:[%s274 + $0x48] sm:$0xf]
      %v302 = vld [vmem:[%s274 + $0x4c] sm:$0xf]
      %v303 = vld [vmem:[%s274 + $0x50] sm:$0xf]
      %v304 = vld [vmem:[%s274 + $0x54] sm:$0xf]
      %v305 = vld [vmem:[%s274 + $0x58] sm:$0xf]
      %v306 = vld [vmem:[%s274 + $0x5c] sm:$0xf]
      %v307 = vld [vmem:[%s274 + $0x60] sm:$0xf]
      %v308 = vld [vmem:[%s274 + $0x64] sm:$0xf]
      %v309 = vld [vmem:[%s274 + $0x68] sm:$0xf]
      %v310 = vld [vmem:[%s274 + $0x6c] sm:$0xf]
      %v311 = vld [vmem:[%s274 + $0x70] sm:$0xf]
      %v312 = vld [vmem:[%s274 + $0x74] sm:$0xf]
      %v313 = vld [vmem:[%s274 + $0x78] sm:$0xf]
      %v314 = vld [vmem:[%s274 + $0x7c] sm:$0xf]
      %v315 = vld [vmem:[%s274 + $0x80] sm:$0xf]
      %v316 = vld [vmem:[%s274 + $0x84] sm:$0xf]
      %v317 = vld [vmem:[%s274 + $0x88] sm:$0xf]
      %v318 = vld [vmem:[%s274 + $0x8c] sm:$0xf]
      %v319 = vld [vmem:[%s274 + $0x90] sm:$0xf]
      %v320 = vld [vmem:[%s274 + $0x94] sm:$0xf]
      %v321 = vld [vmem:[%s274 + $0x98] sm:$0xf]
      %v322 = vld [vmem:[%s274 + $0x9c] sm:$0xf]
      %v323 = vld [vmem:[%s274 + $0xa0] sm:$0xf]
      %v324 = vld [vmem:[%s274 + $0xa4] sm:$0xf]
      %v325 = vld [vmem:[%s274 + $0xa8] sm:$0xf]
      %v326 = vld [vmem:[%s274 + $0xac] sm:$0xf]
      %v327 = vld [vmem:[%s274 + $0xb0] sm:$0xf]
      %v328 = vld [vmem:[%s274 + $0xb4] sm:$0xf]
      %v329 = vld [vmem:[%s274 + $0xb8] sm:$0xf]
      %v330 = vld [vmem:[%s274 + $0xbc] sm:$0xf]
      %v331 = vld [vmem:[%s274 + $0xc0] sm:$0xf]
      %v332 = vld [vmem:[%s274 + $0xc4] sm:$0xf]
      %v333 = vld [vmem:[%s274 + $0xc8] sm:$0xf]
      %v334 = vld [vmem:[%s274 + $0xcc] sm:$0xf]
      %v335 = vld [vmem:[%s274 + $0xd0] sm:$0xf]
      %v336 = vld [vmem:[%s274 + $0xd4] sm:$0xf]
      %v337 = vld [vmem:[%s274 + $0xd8] sm:$0xf]
      %v338 = vld [vmem:[%s274 + $0xdc] sm:$0xf]
      %v339 = vld [vmem:[%s274 + $0xe0] sm:$0xf]
      %v340 = vld [vmem:[%s274 + $0xe4] sm:$0xf]
      %v341 = vld [vmem:[%s274 + $0xe8] sm:$0xf]
      %v342 = vld [vmem:[%s274 + $0xec] sm:$0xf]
      %v343 = vld [vmem:[%s274 + $0xf0] sm:$0xf]
      %v344 = vld [vmem:[%s274 + $0xf4] sm:$0xf]
      %v345 = vld [vmem:[%s274 + $0xf8] sm:$0xf]
      %v346 = vld [vmem:[%s274 + $0xfc] sm:$0xf]
      %v347 = vld [vmem:[%s1] sm:$0xf]
      %v348 = vld [vmem:[%s1 + $0x4] sm:$0xf]
      %v349 = vld [vmem:[%s1 + $0x8] sm:$0xf]
      %v350 = vld [vmem:[%s1 + $0xc] sm:$0xf]
      %v351 = vld [vmem:[%s2] sm:$0x1]
      %v353 = vlaneseq
      %v354 = vshrl.u32 %v353, 7
      %v355 = vsub.s32 0, %v354
      %v356 = vrot.slane %v351, %v355
      %v422 = vunpack.c.l.b16 %v283
      %v423 = vunpack.c.l.b16 %v284
      %v424 = vunpack.c.l.b16 %v285
      %v425 = vunpack.c.l.b16 %v286
      %v426 = vunpack.c.l.b16 %v287
      %v427 = vunpack.c.l.b16 %v288
      %v428 = vunpack.c.l.b16 %v289
      %v429 = vunpack.c.l.b16 %v290
      %v430 = vunpack.c.l.b16 %v291
      %v431 = vunpack.c.l.b16 %v292
      %v432 = vunpack.c.l.b16 %v293
      %v433 = vunpack.c.l.b16 %v294
      %v434 = vunpack.c.l.b16 %v295
      %v435 = vunpack.c.l.b16 %v296
      %v436 = vunpack.c.l.b16 %v297
      %v437 = vunpack.c.l.b16 %v298
      %v438 = vunpack.c.l.b16 %v299
      %v439 = vunpack.c.l.b16 %v300
      %v440 = vunpack.c.l.b16 %v301
      %v441 = vunpack.c.l.b16 %v302
      %v442 = vunpack.c.l.b16 %v303
      %v443 = vunpack.c.l.b16 %v304
      %v444 = vunpack.c.l.b16 %v305
      %v445 = vunpack.c.l.b16 %v306
      %v446 = vunpack.c.l.b16 %v307
      %v447 = vunpack.c.l.b16 %v308
      %v448 = vunpack.c.l.b16 %v309
      %v449 = vunpack.c.l.b16 %v310
      %v450 = vunpack.c.l.b16 %v311
      %v451 = vunpack.c.l.b16 %v312
      %v452 = vunpack.c.l.b16 %v313
      %v453 = vunpack.c.l.b16 %v314
      %v454 = vunpack.c.l.b16 %v315
      %v455 = vunpack.c.l.b16 %v316
      %v456 = vunpack.c.l.b16 %v317
      %v457 = vunpack.c.l.b16 %v318
      %v458 = vunpack.c.l.b16 %v319
      %v459 = vunpack.c.l.b16 %v320
      %v460 = vunpack.c.l.b16 %v321
      %v461 = vunpack.c.l.b16 %v322
      %v462 = vunpack.c.l.b16 %v323
      %v463 = vunpack.c.l.b16 %v324
      %v464 = vunpack.c.l.b16 %v325
      %v465 = vunpack.c.l.b16 %v326
      %v466 = vunpack.c.l.b16 %v327
      %v467 = vunpack.c.l.b16 %v328
      %v468 = vunpack.c.l.b16 %v329
      %v469 = vunpack.c.l.b16 %v330
      %v470 = vunpack.c.l.b16 %v331
      %v471 = vunpack.c.l.b16 %v332
      %v472 = vunpack.c.l.b16 %v333
      %v473 = vunpack.c.l.b16 %v334
      %v474 = vunpack.c.l.b16 %v335
      %v475 = vunpack.c.l.b16 %v336
      %v476 = vunpack.c.l.b16 %v337
      %v477 = vunpack.c.l.b16 %v338
      %v478 = vunpack.c.l.b16 %v339
      %v479 = vunpack.c.l.b16 %v340
      %v480 = vunpack.c.l.b16 %v341
      %v481 = vunpack.c.l.b16 %v342
      %v482 = vunpack.c.l.b16 %v343
      %v483 = vunpack.c.l.b16 %v344
      %v484 = vunpack.c.l.b16 %v345
      %v485 = vunpack.c.l.b16 %v346
      %v486 = vpack.c.b16 %v423, %v422
      %v487 = vpack.c.b16 %v425, %v424
      %v488 = vpack.c.b16 %v427, %v426
      %v489 = vpack.c.b16 %v429, %v428
      %v490 = vpack.c.b16 %v431, %v430
      %v491 = vpack.c.b16 %v433, %v432
      %v492 = vpack.c.b16 %v435, %v434
      %v493 = vpack.c.b16 %v437, %v436
      %v494 = vpack.c.b16 %v439, %v438
      %v495 = vpack.c.b16 %v441, %v440
      %v496 = vpack.c.b16 %v443, %v442
      %v497 = vpack.c.b16 %v445, %v444
      %v498 = vpack.c.b16 %v447, %v446
      %v499 = vpack.c.b16 %v449, %v448
      %v500 = vpack.c.b16 %v451, %v450
      %v501 = vpack.c.b16 %v453, %v452
      %v502 = vpack.c.b16 %v455, %v454
      %v503 = vpack.c.b16 %v457, %v456
      %v504 = vpack.c.b16 %v459, %v458
      %v505 = vpack.c.b16 %v461, %v460
      %v506 = vpack.c.b16 %v463, %v462
      %v507 = vpack.c.b16 %v465, %v464
      %v508 = vpack.c.b16 %v467, %v466
      %v509 = vpack.c.b16 %v469, %v468
      %v510 = vpack.c.b16 %v471, %v470
      %v511 = vpack.c.b16 %v473, %v472
      %v512 = vpack.c.b16 %v475, %v474
      %v513 = vpack.c.b16 %v477, %v476
      %v514 = vpack.c.b16 %v479, %v478
      %v515 = vpack.c.b16 %v481, %v480
      %v516 = vpack.c.b16 %v483, %v482
      %v517 = vpack.c.b16 %v485, %v484
      %v522 = vunpack.c.l.b16 %v347
      %v523 = vunpack.c.l.b16 %v348
      %v524 = vunpack.c.l.b16 %v349
      %v525 = vunpack.c.l.b16 %v350
      %v526 = vpack.c.b16 %v523, %v522
      %v527 = vpack.c.b16 %v525, %v524
      %vm530 = vcmask 261120
      %v532 = vsel %vm530, %v486, 0
      %v535 = vsel %vm530, %v487, 0
      %v538 = vsel %vm530, %v488, 0
      %v541 = vsel %vm530, %v489, 0
      %v544 = vsel %vm530, %v490, 0
      %v547 = vsel %vm530, %v491, 0
      %v550 = vsel %vm530, %v492, 0
      %v553 = vsel %vm530, %v493, 0
      %v556 = vsel %vm530, %v494, 0
      %v559 = vsel %vm530, %v495, 0
      %v562 = vsel %vm530, %v496, 0
      %v565 = vsel %vm530, %v497, 0
      %v568 = vsel %vm530, %v498, 0
      %v571 = vsel %vm530, %v499, 0
      %v574 = vsel %vm530, %v500, 0
      %v577 = vsel %vm530, %v501, 0
      %v580 = vsel %vm530, %v502, 0
      %v583 = vsel %vm530, %v503, 0
      %v586 = vsel %vm530, %v504, 0
      %v589 = vsel %vm530, %v505, 0
      %v592 = vsel %vm530, %v506, 0
      %v595 = vsel %vm530, %v507, 0
      %v598 = vsel %vm530, %v508, 0
      %v601 = vsel %vm530, %v509, 0
      %v604 = vsel %vm530, %v510, 0
      %v607 = vsel %vm530, %v511, 0
      %v610 = vsel %vm530, %v512, 0
      %v613 = vsel %vm530, %v513, 0
      %v616 = vsel %vm530, %v514, 0
      %v619 = vsel %vm530, %v515, 0
      %v622 = vsel %vm530, %v516, 0
      %v625 = vsel %vm530, %v517, 0
      %627 = vmatprep.subr.bf16.mxu0 0
      %628 = vmatpush1.bf16.msra.mxu0 0
      %629 = vmatprep.subr.bf16.mxu0 0
      %630 = vmatpush1.bf16.msra.mxu0 0
      %631 = vmatprep.subr.bf16.mxu0 0
      %632 = vmatpush1.bf16.msra.mxu0 0
      %633 = vmatprep.subr.bf16.mxu0 0
      %634 = vmatpush1.bf16.msra.mxu0 0
      %635 = vmatprep.subr.bf16.mxu0 0
      %636 = vmatpush1.bf16.msra.mxu0 0
      %637 = vmatprep.subr.bf16.mxu0 0
      %638 = vmatpush1.bf16.msra.mxu0 0
      %639 = vmatprep.subr.bf16.mxu0 0
      %640 = vmatpush1.bf16.msra.mxu0 %v527
      %641 = vmatprep.subr.bf16.mxu0 0
      %642 = vmatpush1.bf16.msra.mxu0 %v526
      %643 = vmatprep.subr.bf16.mxu0 0
      %644 = vmatpush2.bf16.msra.mxu0 0
      %645 = vmatprep.subr.bf16.mxu0 0
      %646 = vmatpush2.bf16.msra.mxu0 0
      %647 = vmatprep.subr.bf16.mxu0 0
      %648 = vmatpush2.bf16.msra.mxu0 0
      %649 = vmatprep.subr.bf16.mxu0 0
      %650 = vmatpush2.bf16.msra.mxu0 0
      %651 = vmatprep.subr.bf16.mxu0 0
      %652 = vmatpush2.bf16.msra.mxu0 0
      %653 = vmatprep.subr.bf16.mxu0 0
      %654 = vmatpush2.bf16.msra.mxu0 0
      %655 = vmatprep.subr.bf16.mxu0 0
      %656 = vmatpush2.bf16.msra.mxu0 0
      %657 = vmatprep.subr.bf16.mxu0 0
      %658 = vmatpush2.bf16.msra.mxu0 0
      %659 = vmatprep.mubr.bf16.mxu0 0
      %660 = vmatmul.mubr.bf16.gmra.mxu0 %v532
      %v661 = vpop.f32.mrf.mxu0
      %v662 = vadd.f32 %v356, %v661
      %v663 = vpop.f32.mrf.mxu0
      %v664 = vpop.f32.mrf.mxu0
      %v665 = vadd.f32 %v356, %v664
      %v666 = vpop.f32.mrf.mxu0
      %667 = vmatprep.mubr.bf16.mxu0 0
      %668 = vmatmul.mubr.bf16.gmra.mxu0 %v535
      %v669 = vpop.f32.mrf.mxu0
      %v670 = vadd.f32 %v356, %v669
      %v671 = vpop.f32.mrf.mxu0
      %v672 = vpop.f32.mrf.mxu0
      %v673 = vadd.f32 %v356, %v672
      %v674 = vpop.f32.mrf.mxu0
      %675 = vmatprep.mubr.bf16.mxu0 0
      %676 = vmatmul.mubr.bf16.gmra.mxu0 %v538
      %v677 = vpop.f32.mrf.mxu0
      %v678 = vadd.f32 %v356, %v677
      %v679 = vpop.f32.mrf.mxu0
      %v680 = vpop.f32.mrf.mxu0
      %v681 = vadd.f32 %v356, %v680
      %v682 = vpop.f32.mrf.mxu0
      %683 = vmatprep.mubr.bf16.mxu0 0
      %684 = vmatmul.mubr.bf16.gmra.mxu0 %v541
      %v685 = vpop.f32.mrf.mxu0
      %v686 = vadd.f32 %v356, %v685
      %v687 = vpop.f32.mrf.mxu0
      %v688 = vpop.f32.mrf.mxu0
      %v689 = vadd.f32 %v356, %v688
      %v690 = vpop.f32.mrf.mxu0
      %691 = vmatprep.mubr.bf16.mxu0 0
      %692 = vmatmul.mubr.bf16.gmra.mxu0 %v544
      %v693 = vpop.f32.mrf.mxu0
      %v694 = vadd.f32 %v356, %v693
      %v695 = vpop.f32.mrf.mxu0
      %v696 = vpop.f32.mrf.mxu0
      %v697 = vadd.f32 %v356, %v696
      %v698 = vpop.f32.mrf.mxu0
      %699 = vmatprep.mubr.bf16.mxu0 0
      %700 = vmatmul.mubr.bf16.gmra.mxu0 %v547
      %v701 = vpop.f32.mrf.mxu0
      %v702 = vadd.f32 %v356, %v701
      %v703 = vpop.f32.mrf.mxu0
      %v704 = vpop.f32.mrf.mxu0
      %v705 = vadd.f32 %v356, %v704
      %v706 = vpop.f32.mrf.mxu0
      %707 = vmatprep.mubr.bf16.mxu0 0
      %708 = vmatmul.mubr.bf16.gmra.mxu0 %v550
      %v709 = vpop.f32.mrf.mxu0
      %v710 = vadd.f32 %v356, %v709
      %v711 = vpop.f32.mrf.mxu0
      %v712 = vpop.f32.mrf.mxu0
      %v713 = vadd.f32 %v356, %v712
      %v714 = vpop.f32.mrf.mxu0
      %715 = vmatprep.mubr.bf16.mxu0 0
      %716 = vmatmul.mubr.bf16.gmra.mxu0 %v553
      %v717 = vpop.f32.mrf.mxu0
      %v718 = vadd.f32 %v356, %v717
      %v719 = vpop.f32.mrf.mxu0
      %v720 = vpop.f32.mrf.mxu0
      %v721 = vadd.f32 %v356, %v720
      %v722 = vpop.f32.mrf.mxu0
      %723 = vmatprep.mubr.bf16.mxu0 0
      %724 = vmatmul.mubr.bf16.gmra.mxu0 %v556
      %v725 = vpop.f32.mrf.mxu0
      %v726 = vadd.f32 %v356, %v725
      %v727 = vpop.f32.mrf.mxu0
      %v728 = vpop.f32.mrf.mxu0
      %v729 = vadd.f32 %v356, %v728
      %v730 = vpop.f32.mrf.mxu0
      %731 = vmatprep.mubr.bf16.mxu0 0
      %732 = vmatmul.mubr.bf16.gmra.mxu0 %v559
      %v733 = vpop.f32.mrf.mxu0
      %v734 = vadd.f32 %v356, %v733
      %v735 = vpop.f32.mrf.mxu0
      %v736 = vpop.f32.mrf.mxu0
      %v737 = vadd.f32 %v356, %v736
      %v738 = vpop.f32.mrf.mxu0
      %739 = vmatprep.mubr.bf16.mxu0 0
      %740 = vmatmul.mubr.bf16.gmra.mxu0 %v562
      %v741 = vpop.f32.mrf.mxu0
      %v742 = vadd.f32 %v356, %v741
      %v743 = vpop.f32.mrf.mxu0
      %v744 = vpop.f32.mrf.mxu0
      %v745 = vadd.f32 %v356, %v744
      %v746 = vpop.f32.mrf.mxu0
      %747 = vmatprep.mubr.bf16.mxu0 0
      %748 = vmatmul.mubr.bf16.gmra.mxu0 %v565
      %v749 = vpop.f32.mrf.mxu0
      %v750 = vadd.f32 %v356, %v749
      %v751 = vpop.f32.mrf.mxu0
      %v752 = vpop.f32.mrf.mxu0
      %v753 = vadd.f32 %v356, %v752
      %v754 = vpop.f32.mrf.mxu0
      %755 = vmatprep.mubr.bf16.mxu0 0
      %756 = vmatmul.mubr.bf16.gmra.mxu0 %v568
      %v757 = vpop.f32.mrf.mxu0
      %v758 = vadd.f32 %v356, %v757
      %v759 = vpop.f32.mrf.mxu0
      %v760 = vpop.f32.mrf.mxu0
      %v761 = vadd.f32 %v356, %v760
      %v762 = vpop.f32.mrf.mxu0
      %763 = vmatprep.mubr.bf16.mxu0 0
      %764 = vmatmul.mubr.bf16.gmra.mxu0 %v571
      %v765 = vpop.f32.mrf.mxu0
      %v766 = vadd.f32 %v356, %v765
      %v767 = vpop.f32.mrf.mxu0
      %v768 = vpop.f32.mrf.mxu0
      %v769 = vadd.f32 %v356, %v768
      %v770 = vpop.f32.mrf.mxu0
      %771 = vmatprep.mubr.bf16.mxu0 0
      %772 = vmatmul.mubr.bf16.gmra.mxu0 %v574
      %v773 = vpop.f32.mrf.mxu0
      %v774 = vadd.f32 %v356, %v773
      %v775 = vpop.f32.mrf.mxu0
      %v776 = vpop.f32.mrf.mxu0
      %v777 = vadd.f32 %v356, %v776
      %v778 = vpop.f32.mrf.mxu0
      %779 = vmatprep.mubr.bf16.mxu0 0
      %780 = vmatmul.mubr.bf16.gmra.mxu0 %v577
      %v781 = vpop.f32.mrf.mxu0
      %v782 = vadd.f32 %v356, %v781
      %v783 = vpop.f32.mrf.mxu0
      %v784 = vpop.f32.mrf.mxu0
      %v785 = vadd.f32 %v356, %v784
      %v786 = vpop.f32.mrf.mxu0
      %787 = vmatprep.mubr.bf16.mxu0 0
      %788 = vmatmul.mubr.bf16.gmra.mxu0 %v580
      %v789 = vpop.f32.mrf.mxu0
      %v790 = vadd.f32 %v356, %v789
      %v791 = vpop.f32.mrf.mxu0
      %v792 = vpop.f32.mrf.mxu0
      %v793 = vadd.f32 %v356, %v792
      %v794 = vpop.f32.mrf.mxu0
      %795 = vmatprep.mubr.bf16.mxu0 0
      %796 = vmatmul.mubr.bf16.gmra.mxu0 %v583
      %v797 = vpop.f32.mrf.mxu0
      %v798 = vadd.f32 %v356, %v797
      %v799 = vpop.f32.mrf.mxu0
      %v800 = vpop.f32.mrf.mxu0
      %v801 = vadd.f32 %v356, %v800
      %v802 = vpop.f32.mrf.mxu0
      %803 = vmatprep.mubr.bf16.mxu0 0
      %804 = vmatmul.mubr.bf16.gmra.mxu0 %v586
      %v805 = vpop.f32.mrf.mxu0
      %v806 = vadd.f32 %v356, %v805
      %v807 = vpop.f32.mrf.mxu0
      %v808 = vpop.f32.mrf.mxu0
      %v809 = vadd.f32 %v356, %v808
      %v810 = vpop.f32.mrf.mxu0
      %811 = vmatprep.mubr.bf16.mxu0 0
      %812 = vmatmul.mubr.bf16.gmra.mxu0 %v589
      %v813 = vpop.f32.mrf.mxu0
      %v814 = vadd.f32 %v356, %v813
      %v815 = vpop.f32.mrf.mxu0
      %v816 = vpop.f32.mrf.mxu0
      %v817 = vadd.f32 %v356, %v816
      %v818 = vpop.f32.mrf.mxu0
      %819 = vmatprep.mubr.bf16.mxu0 0
      %820 = vmatmul.mubr.bf16.gmra.mxu0 %v592
      %v821 = vpop.f32.mrf.mxu0
      %v822 = vadd.f32 %v356, %v821
      %v823 = vpop.f32.mrf.mxu0
      %v824 = vpop.f32.mrf.mxu0
      %v825 = vadd.f32 %v356, %v824
      %v826 = vpop.f32.mrf.mxu0
      %827 = vmatprep.mubr.bf16.mxu0 0
      %828 = vmatmul.mubr.bf16.gmra.mxu0 %v595
      %v829 = vpop.f32.mrf.mxu0
      %v830 = vadd.f32 %v356, %v829
      %v831 = vpop.f32.mrf.mxu0
      %v832 = vpop.f32.mrf.mxu0
      %v833 = vadd.f32 %v356, %v832
      %v834 = vpop.f32.mrf.mxu0
      %835 = vmatprep.mubr.bf16.mxu0 0
      %836 = vmatmul.mubr.bf16.gmra.mxu0 %v598
      %v837 = vpop.f32.mrf.mxu0
      %v838 = vadd.f32 %v356, %v837
      %v839 = vpop.f32.mrf.mxu0
      %v840 = vpop.f32.mrf.mxu0
      %v841 = vadd.f32 %v356, %v840
      %v842 = vpop.f32.mrf.mxu0
      %843 = vmatprep.mubr.bf16.mxu0 0
      %844 = vmatmul.mubr.bf16.gmra.mxu0 %v601
      %v845 = vpop.f32.mrf.mxu0
      %v846 = vadd.f32 %v356, %v845
      %v847 = vpop.f32.mrf.mxu0
      %v848 = vpop.f32.mrf.mxu0
      %v849 = vadd.f32 %v356, %v848
      %v850 = vpop.f32.mrf.mxu0
      %851 = vmatprep.mubr.bf16.mxu0 0
      %852 = vmatmul.mubr.bf16.gmra.mxu0 %v604
      %v853 = vpop.f32.mrf.mxu0
      %v854 = vadd.f32 %v356, %v853
      %v855 = vpop.f32.mrf.mxu0
      %v856 = vpop.f32.mrf.mxu0
      %v857 = vadd.f32 %v356, %v856
      %v858 = vpop.f32.mrf.mxu0
      %859 = vmatprep.mubr.bf16.mxu0 0
      %860 = vmatmul.mubr.bf16.gmra.mxu0 %v607
      %v861 = vpop.f32.mrf.mxu0
      %v862 = vadd.f32 %v356, %v861
      %v863 = vpop.f32.mrf.mxu0
      %v864 = vpop.f32.mrf.mxu0
      %v865 = vadd.f32 %v356, %v864
      %v866 = vpop.f32.mrf.mxu0
      %867 = vmatprep.mubr.bf16.mxu0 0
      %868 = vmatmul.mubr.bf16.gmra.mxu0 %v610
      %v869 = vpop.f32.mrf.mxu0
      %v870 = vadd.f32 %v356, %v869
      %v871 = vpop.f32.mrf.mxu0
      %v872 = vpop.f32.mrf.mxu0
      %v873 = vadd.f32 %v356, %v872
      %v874 = vpop.f32.mrf.mxu0
      %875 = vmatprep.mubr.bf16.mxu0 0
      %876 = vmatmul.mubr.bf16.gmra.mxu0 %v613
      %v877 = vpop.f32.mrf.mxu0
      %v878 = vadd.f32 %v356, %v877
      %v879 = vpop.f32.mrf.mxu0
      %v880 = vpop.f32.mrf.mxu0
      %v881 = vadd.f32 %v356, %v880
      %v882 = vpop.f32.mrf.mxu0
      %883 = vmatprep.mubr.bf16.mxu0 0
      %884 = vmatmul.mubr.bf16.gmra.mxu0 %v616
      %v885 = vpop.f32.mrf.mxu0
      %v886 = vadd.f32 %v356, %v885
      %v887 = vpop.f32.mrf.mxu0
      %v888 = vpop.f32.mrf.mxu0
      %v889 = vadd.f32 %v356, %v888
      %v890 = vpop.f32.mrf.mxu0
      %891 = vmatprep.mubr.bf16.mxu0 0
      %892 = vmatmul.mubr.bf16.gmra.mxu0 %v619
      %v893 = vpop.f32.mrf.mxu0
      %v894 = vadd.f32 %v356, %v893
      %v895 = vpop.f32.mrf.mxu0
      %v896 = vpop.f32.mrf.mxu0
      %v897 = vadd.f32 %v356, %v896
      %v898 = vpop.f32.mrf.mxu0
      %899 = vmatprep.mubr.bf16.mxu0 0
      %900 = vmatmul.mubr.bf16.gmra.mxu0 %v622
      %v901 = vpop.f32.mrf.mxu0
      %v902 = vadd.f32 %v356, %v901
      %v903 = vpop.f32.mrf.mxu0
      %v904 = vpop.f32.mrf.mxu0
      %v905 = vadd.f32 %v356, %v904
      %v906 = vpop.f32.mrf.mxu0
      %907 = vmatprep.mubr.bf16.mxu0 0
      %908 = vmatmul.mubr.bf16.gmra.mxu0 %v625
      %v909 = vpop.f32.mrf.mxu0
      %v910 = vadd.f32 %v356, %v909
      %v911 = vpop.f32.mrf.mxu0
      %v912 = vpop.f32.mrf.mxu0
      %v913 = vadd.f32 %v356, %v912
      %v914 = vpop.f32.mrf.mxu0
      %915 = vdwg.mxu0
      %v916 = vmax.f32 %v662, 0.0
      %v917 = vmax.f32 %v665, 0.0
      %v918 = vmax.f32 %v670, 0.0
      %v919 = vmax.f32 %v673, 0.0
      %v920 = vmax.f32 %v678, 0.0
      %v921 = vmax.f32 %v681, 0.0
      %v922 = vmax.f32 %v686, 0.0
      %v923 = vmax.f32 %v689, 0.0
      %v924 = vmax.f32 %v694, 0.0
      %v925 = vmax.f32 %v697, 0.0
      %v926 = vmax.f32 %v702, 0.0
      %v927 = vmax.f32 %v705, 0.0
      %v928 = vmax.f32 %v710, 0.0
      %v929 = vmax.f32 %v713, 0.0
      %v930 = vmax.f32 %v718, 0.0
      %v931 = vmax.f32 %v721, 0.0
      %v932 = vmax.f32 %v726, 0.0
      %v933 = vmax.f32 %v729, 0.0
      %v934 = vmax.f32 %v734, 0.0
      %v935 = vmax.f32 %v737, 0.0
      %v936 = vmax.f32 %v742, 0.0
      %v937 = vmax.f32 %v745, 0.0
      %v938 = vmax.f32 %v750, 0.0
      %v939 = vmax.f32 %v753, 0.0
      %v940 = vmax.f32 %v758, 0.0
      %v941 = vmax.f32 %v761, 0.0
      %v942 = vmax.f32 %v766, 0.0
      %v943 = vmax.f32 %v769, 0.0
      %v944 = vmax.f32 %v774, 0.0
      %v945 = vmax.f32 %v777, 0.0
      %v946 = vmax.f32 %v782, 0.0
      %v947 = vmax.f32 %v785, 0.0
      %v948 = vmax.f32 %v790, 0.0
      %v949 = vmax.f32 %v793, 0.0
      %v950 = vmax.f32 %v798, 0.0
      %v951 = vmax.f32 %v801, 0.0
      %v952 = vmax.f32 %v806, 0.0
      %v953 = vmax.f32 %v809, 0.0
      %v954 = vmax.f32 %v814, 0.0
      %v955 = vmax.f32 %v817, 0.0
      %v956 = vmax.f32 %v822, 0.0
      %v957 = vmax.f32 %v825, 0.0
      %v958 = vmax.f32 %v830, 0.0
      %v959 = vmax.f32 %v833, 0.0
      %v960 = vmax.f32 %v838, 0.0
      %v961 = vmax.f32 %v841, 0.0
      %v962 = vmax.f32 %v846, 0.0
      %v963 = vmax.f32 %v849, 0.0
      %v964 = vmax.f32 %v854, 0.0
      %v965 = vmax.f32 %v857, 0.0
      %v966 = vmax.f32 %v862, 0.0
      %v967 = vmax.f32 %v865, 0.0
      %v968 = vmax.f32 %v870, 0.0
      %v969 = vmax.f32 %v873, 0.0
      %v970 = vmax.f32 %v878, 0.0
      %v971 = vmax.f32 %v881, 0.0
      %v972 = vmax.f32 %v886, 0.0
      %v973 = vmax.f32 %v889, 0.0
      %v974 = vmax.f32 %v894, 0.0
      %v975 = vmax.f32 %v897, 0.0
      %v976 = vmax.f32 %v902, 0.0
      %v977 = vmax.f32 %v905, 0.0
      %v978 = vmax.f32 %v910, 0.0
      %v979 = vmax.f32 %v913, 0.0
      %v980 = vpack.c.bf16 %v917, %v916
      %v981 = vpack.c.bf16 %v919, %v918
      %v982 = vpack.c.bf16 %v921, %v920
      %v983 = vpack.c.bf16 %v923, %v922
      %v984 = vpack.c.bf16 %v925, %v924
      %v985 = vpack.c.bf16 %v927, %v926
      %v986 = vpack.c.bf16 %v929, %v928
      %v987 = vpack.c.bf16 %v931, %v930
      %v988 = vpack.c.bf16 %v933, %v932
      %v989 = vpack.c.bf16 %v935, %v934
      %v990 = vpack.c.bf16 %v937, %v936
      %v991 = vpack.c.bf16 %v939, %v938
      %v992 = vpack.c.bf16 %v941, %v940
      %v993 = vpack.c.bf16 %v943, %v942
      %v994 = vpack.c.bf16 %v945, %v944
      %v995 = vpack.c.bf16 %v947, %v946
      %v996 = vpack.c.bf16 %v949, %v948
      %v997 = vpack.c.bf16 %v951, %v950
      %v998 = vpack.c.bf16 %v953, %v952
      %v999 = vpack.c.bf16 %v955, %v954
      %v1000 = vpack.c.bf16 %v957, %v956
      %v1001 = vpack.c.bf16 %v959, %v958
      %v1002 = vpack.c.bf16 %v961, %v960
      %v1003 = vpack.c.bf16 %v963, %v962
      %v1004 = vpack.c.bf16 %v965, %v964
      %v1005 = vpack.c.bf16 %v967, %v966
      %v1006 = vpack.c.bf16 %v969, %v968
      %v1007 = vpack.c.bf16 %v971, %v970
      %v1008 = vpack.c.bf16 %v973, %v972
      %v1009 = vpack.c.bf16 %v975, %v974
      %v1010 = vpack.c.bf16 %v977, %v976
      %v1011 = vpack.c.bf16 %v979, %v978
      %v1012 = vld [vmem:[%s3] sm:$0xf]
      %v1013 = vld [vmem:[%s3 + $0x4] sm:$0xf]
      %v1014 = vld [vmem:[%s3 + $0x8] sm:$0xf]
      %v1015 = vld [vmem:[%s3 + $0xc] sm:$0xf]
      %v1016 = vld [vmem:[%s3 + $0x10] sm:$0xf]
      %v1017 = vld [vmem:[%s3 + $0x14] sm:$0xf]
      %v1018 = vld [vmem:[%s3 + $0x18] sm:$0xf]
      %v1019 = vld [vmem:[%s3 + $0x1c] sm:$0xf]
      %v1020 = vld [vmem:[%s4] sm:$0x1]
      %v1022 = vlaneseq
      %v1023 = vshrl.u32 %v1022, 7
      %v1024 = vsub.s32 0, %v1023
      %v1025 = vrot.slane %v1020, %v1024
      %v1035 = vunpack.c.l.b16 %v1012
      %v1036 = vunpack.c.l.b16 %v1013
      %v1037 = vunpack.c.l.b16 %v1014
      %v1038 = vunpack.c.l.b16 %v1015
      %v1039 = vunpack.c.l.b16 %v1016
      %v1040 = vunpack.c.l.b16 %v1017
      %v1041 = vunpack.c.l.b16 %v1018
      %v1042 = vunpack.c.l.b16 %v1019
      %v1043 = vpack.c.b16 %v1036, %v1035
      %v1044 = vpack.c.b16 %v1038, %v1037
      %v1045 = vpack.c.b16 %v1040, %v1039
      %v1046 = vpack.c.b16 %v1042, %v1041
      %vm1051 = vcmask 523264
      %v1053 = vsel %vm1051, %v980, 0
      %v1056 = vsel %vm1051, %v981, 0
      %v1059 = vsel %vm1051, %v982, 0
      %v1062 = vsel %vm1051, %v983, 0
      %v1065 = vsel %vm1051, %v984, 0
      %v1068 = vsel %vm1051, %v985, 0
      %v1071 = vsel %vm1051, %v986, 0
      %v1074 = vsel %vm1051, %v987, 0
      %v1077 = vsel %vm1051, %v988, 0
      %v1080 = vsel %vm1051, %v989, 0
      %v1083 = vsel %vm1051, %v990, 0
      %v1086 = vsel %vm1051, %v991, 0
      %v1089 = vsel %vm1051, %v992, 0
      %v1092 = vsel %vm1051, %v993, 0
      %v1095 = vsel %vm1051, %v994, 0
      %v1098 = vsel %vm1051, %v995, 0
      %v1101 = vsel %vm1051, %v996, 0
      %v1104 = vsel %vm1051, %v997, 0
      %v1107 = vsel %vm1051, %v998, 0
      %v1110 = vsel %vm1051, %v999, 0
      %v1113 = vsel %vm1051, %v1000, 0
      %v1116 = vsel %vm1051, %v1001, 0
      %v1119 = vsel %vm1051, %v1002, 0
      %v1122 = vsel %vm1051, %v1003, 0
      %v1125 = vsel %vm1051, %v1004, 0
      %v1128 = vsel %vm1051, %v1005, 0
      %v1131 = vsel %vm1051, %v1006, 0
      %v1134 = vsel %vm1051, %v1007, 0
      %v1137 = vsel %vm1051, %v1008, 0
      %v1140 = vsel %vm1051, %v1009, 0
      %v1143 = vsel %vm1051, %v1010, 0
      %v1146 = vsel %vm1051, %v1011, 0
      %1148 = vmatprep.subr.bf16.mxu0 0
      %1149 = vmatpush1.bf16.msra.mxu0 0
      %1150 = vmatprep.subr.bf16.mxu0 0
      %1151 = vmatpush1.bf16.msra.mxu0 0
      %1152 = vmatprep.subr.bf16.mxu0 0
      %1153 = vmatpush1.bf16.msra.mxu0 0
      %1154 = vmatprep.subr.bf16.mxu0 0
      %1155 = vmatpush1.bf16.msra.mxu0 0
      %1156 = vmatprep.subr.bf16.mxu0 0
      %1157 = vmatpush1.bf16.msra.mxu0 %v1046
      %1158 = vmatprep.subr.bf16.mxu0 0
      %1159 = vmatpush1.bf16.msra.mxu0 %v1045
      %1160 = vmatprep.subr.bf16.mxu0 0
      %1161 = vmatpush1.bf16.msra.mxu0 %v1044
      %1162 = vmatprep.subr.bf16.mxu0 0
      %1163 = vmatpush1.bf16.msra.mxu0 %v1043
      %1164 = vmatprep.subr.bf16.mxu0 0
      %1165 = vmatpush2.bf16.msra.mxu0 0
      %1166 = vmatprep.subr.bf16.mxu0 0
      %1167 = vmatpush2.bf16.msra.mxu0 0
      %1168 = vmatprep.subr.bf16.mxu0 0
      %1169 = vmatpush2.bf16.msra.mxu0 0
      %1170 = vmatprep.subr.bf16.mxu0 0
      %1171 = vmatpush2.bf16.msra.mxu0 0
      %1172 = vmatprep.subr.bf16.mxu0 0
      %1173 = vmatpush2.bf16.msra.mxu0 0
      %1174 = vmatprep.subr.bf16.mxu0 0
      %1175 = vmatpush2.bf16.msra.mxu0 0
      %1176 = vmatprep.subr.bf16.mxu0 0
      %1177 = vmatpush2.bf16.msra.mxu0 0
      %1178 = vmatprep.subr.bf16.mxu0 0
      %1179 = vmatpush2.bf16.msra.mxu0 0
      %1180 = vmatprep.mubr.bf16.mxu0 0
      %1181 = vmatmul.mubr.bf16.gmra.mxu0 %v1053
      %v1182 = vpop.f32.mrf.mxu0
      %v1183 = vadd.f32 %v1025, %v1182
      %v1184 = vpop.f32.mrf.mxu0
      %v1185 = vpop.f32.mrf.mxu0
      %v1186 = vadd.f32 %v1025, %v1185
      %v1187 = vpop.f32.mrf.mxu0
      %1188 = vmatprep.mubr.bf16.mxu0 0
      %1189 = vmatmul.mubr.bf16.gmra.mxu0 %v1056
      %v1190 = vpop.f32.mrf.mxu0
      %v1191 = vadd.f32 %v1025, %v1190
      %v1192 = vpop.f32.mrf.mxu0
      %v1193 = vpop.f32.mrf.mxu0
      %v1194 = vadd.f32 %v1025, %v1193
      %v1195 = vpop.f32.mrf.mxu0
      %1196 = vmatprep.mubr.bf16.mxu0 0
      %1197 = vmatmul.mubr.bf16.gmra.mxu0 %v1059
      %v1198 = vpop.f32.mrf.mxu0
      %v1199 = vadd.f32 %v1025, %v1198
      %v1200 = vpop.f32.mrf.mxu0
      %v1201 = vpop.f32.mrf.mxu0
      %v1202 = vadd.f32 %v1025, %v1201
      %v1203 = vpop.f32.mrf.mxu0
      %1204 = vmatprep.mubr.bf16.mxu0 0
      %1205 = vmatmul.mubr.bf16.gmra.mxu0 %v1062
      %v1206 = vpop.f32.mrf.mxu0
      %v1207 = vadd.f32 %v1025, %v1206
      %v1208 = vpop.f32.mrf.mxu0
      %v1209 = vpop.f32.mrf.mxu0
      %v1210 = vadd.f32 %v1025, %v1209
      %v1211 = vpop.f32.mrf.mxu0
      %1212 = vmatprep.mubr.bf16.mxu0 0
      %1213 = vmatmul.mubr.bf16.gmra.mxu0 %v1065
      %v1214 = vpop.f32.mrf.mxu0
      %v1215 = vadd.f32 %v1025, %v1214
      %v1216 = vpop.f32.mrf.mxu0
      %v1217 = vpop.f32.mrf.mxu0
      %v1218 = vadd.f32 %v1025, %v1217
      %v1219 = vpop.f32.mrf.mxu0
      %1220 = vmatprep.mubr.bf16.mxu0 0
      %1221 = vmatmul.mubr.bf16.gmra.mxu0 %v1068
      %v1222 = vpop.f32.mrf.mxu0
      %v1223 = vadd.f32 %v1025, %v1222
      %v1224 = vpop.f32.mrf.mxu0
      %v1225 = vpop.f32.mrf.mxu0
      %v1226 = vadd.f32 %v1025, %v1225
      %v1227 = vpop.f32.mrf.mxu0
      %1228 = vmatprep.mubr.bf16.mxu0 0
      %1229 = vmatmul.mubr.bf16.gmra.mxu0 %v1071
      %v1230 = vpop.f32.mrf.mxu0
      %v1231 = vadd.f32 %v1025, %v1230
      %v1232 = vpop.f32.mrf.mxu0
      %v1233 = vpop.f32.mrf.mxu0
      %v1234 = vadd.f32 %v1025, %v1233
      %v1235 = vpop.f32.mrf.mxu0
      %1236 = vmatprep.mubr.bf16.mxu0 0
      %1237 = vmatmul.mubr.bf16.gmra.mxu0 %v1074
      %v1238 = vpop.f32.mrf.mxu0
      %v1239 = vadd.f32 %v1025, %v1238
      %v1240 = vpop.f32.mrf.mxu0
      %v1241 = vpop.f32.mrf.mxu0
      %v1242 = vadd.f32 %v1025, %v1241
      %v1243 = vpop.f32.mrf.mxu0
      %1244 = vmatprep.mubr.bf16.mxu0 0
      %1245 = vmatmul.mubr.bf16.gmra.mxu0 %v1077
      %v1246 = vpop.f32.mrf.mxu0
      %v1247 = vadd.f32 %v1025, %v1246
      %v1248 = vpop.f32.mrf.mxu0
      %v1249 = vpop.f32.mrf.mxu0
      %v1250 = vadd.f32 %v1025, %v1249
      %v1251 = vpop.f32.mrf.mxu0
      %1252 = vmatprep.mubr.bf16.mxu0 0
      %1253 = vmatmul.mubr.bf16.gmra.mxu0 %v1080
      %v1254 = vpop.f32.mrf.mxu0
      %v1255 = vadd.f32 %v1025, %v1254
      %v1256 = vpop.f32.mrf.mxu0
      %v1257 = vpop.f32.mrf.mxu0
      %v1258 = vadd.f32 %v1025, %v1257
      %v1259 = vpop.f32.mrf.mxu0
      %1260 = vmatprep.mubr.bf16.mxu0 0
      %1261 = vmatmul.mubr.bf16.gmra.mxu0 %v1083
      %v1262 = vpop.f32.mrf.mxu0
      %v1263 = vadd.f32 %v1025, %v1262
      %v1264 = vpop.f32.mrf.mxu0
      %v1265 = vpop.f32.mrf.mxu0
      %v1266 = vadd.f32 %v1025, %v1265
      %v1267 = vpop.f32.mrf.mxu0
      %1268 = vmatprep.mubr.bf16.mxu0 0
      %1269 = vmatmul.mubr.bf16.gmra.mxu0 %v1086
      %v1270 = vpop.f32.mrf.mxu0
      %v1271 = vadd.f32 %v1025, %v1270
      %v1272 = vpop.f32.mrf.mxu0
      %v1273 = vpop.f32.mrf.mxu0
      %v1274 = vadd.f32 %v1025, %v1273
      %v1275 = vpop.f32.mrf.mxu0
      %1276 = vmatprep.mubr.bf16.mxu0 0
      %1277 = vmatmul.mubr.bf16.gmra.mxu0 %v1089
      %v1278 = vpop.f32.mrf.mxu0
      %v1279 = vadd.f32 %v1025, %v1278
      %v1280 = vpop.f32.mrf.mxu0
      %v1281 = vpop.f32.mrf.mxu0
      %v1282 = vadd.f32 %v1025, %v1281
      %v1283 = vpop.f32.mrf.mxu0
      %1284 = vmatprep.mubr.bf16.mxu0 0
      %1285 = vmatmul.mubr.bf16.gmra.mxu0 %v1092
      %v1286 = vpop.f32.mrf.mxu0
      %v1287 = vadd.f32 %v1025, %v1286
      %v1288 = vpop.f32.mrf.mxu0
      %v1289 = vpop.f32.mrf.mxu0
      %v1290 = vadd.f32 %v1025, %v1289
      %v1291 = vpop.f32.mrf.mxu0
      %1292 = vmatprep.mubr.bf16.mxu0 0
      %1293 = vmatmul.mubr.bf16.gmra.mxu0 %v1095
      %v1294 = vpop.f32.mrf.mxu0
      %v1295 = vadd.f32 %v1025, %v1294
      %v1296 = vpop.f32.mrf.mxu0
      %v1297 = vpop.f32.mrf.mxu0
      %v1298 = vadd.f32 %v1025, %v1297
      %v1299 = vpop.f32.mrf.mxu0
      %1300 = vmatprep.mubr.bf16.mxu0 0
      %1301 = vmatmul.mubr.bf16.gmra.mxu0 %v1098
      %v1302 = vpop.f32.mrf.mxu0
      %v1303 = vadd.f32 %v1025, %v1302
      %v1304 = vpop.f32.mrf.mxu0
      %v1305 = vpop.f32.mrf.mxu0
      %v1306 = vadd.f32 %v1025, %v1305
      %v1307 = vpop.f32.mrf.mxu0
      %1308 = vmatprep.mubr.bf16.mxu0 0
      %1309 = vmatmul.mubr.bf16.gmra.mxu0 %v1101
      %v1310 = vpop.f32.mrf.mxu0
      %v1311 = vadd.f32 %v1025, %v1310
      %v1312 = vpop.f32.mrf.mxu0
      %v1313 = vpop.f32.mrf.mxu0
      %v1314 = vadd.f32 %v1025, %v1313
      %v1315 = vpop.f32.mrf.mxu0
      %1316 = vmatprep.mubr.bf16.mxu0 0
      %1317 = vmatmul.mubr.bf16.gmra.mxu0 %v1104
      %v1318 = vpop.f32.mrf.mxu0
      %v1319 = vadd.f32 %v1025, %v1318
      %v1320 = vpop.f32.mrf.mxu0
      %v1321 = vpop.f32.mrf.mxu0
      %v1322 = vadd.f32 %v1025, %v1321
      %v1323 = vpop.f32.mrf.mxu0
      %1324 = vmatprep.mubr.bf16.mxu0 0
      %1325 = vmatmul.mubr.bf16.gmra.mxu0 %v1107
      %v1326 = vpop.f32.mrf.mxu0
      %v1327 = vadd.f32 %v1025, %v1326
      %v1328 = vpop.f32.mrf.mxu0
      %v1329 = vpop.f32.mrf.mxu0
      %v1330 = vadd.f32 %v1025, %v1329
      %v1331 = vpop.f32.mrf.mxu0
      %1332 = vmatprep.mubr.bf16.mxu0 0
      %1333 = vmatmul.mubr.bf16.gmra.mxu0 %v1110
      %v1334 = vpop.f32.mrf.mxu0
      %v1335 = vadd.f32 %v1025, %v1334
      %v1336 = vpop.f32.mrf.mxu0
      %v1337 = vpop.f32.mrf.mxu0
      %v1338 = vadd.f32 %v1025, %v1337
      %v1339 = vpop.f32.mrf.mxu0
      %1340 = vmatprep.mubr.bf16.mxu0 0
      %1341 = vmatmul.mubr.bf16.gmra.mxu0 %v1113
      %v1342 = vpop.f32.mrf.mxu0
      %v1343 = vadd.f32 %v1025, %v1342
      %v1344 = vpop.f32.mrf.mxu0
      %v1345 = vpop.f32.mrf.mxu0
      %v1346 = vadd.f32 %v1025, %v1345
      %v1347 = vpop.f32.mrf.mxu0
      %1348 = vmatprep.mubr.bf16.mxu0 0
      %1349 = vmatmul.mubr.bf16.gmra.mxu0 %v1116
      %v1350 = vpop.f32.mrf.mxu0
      %v1351 = vadd.f32 %v1025, %v1350
      %v1352 = vpop.f32.mrf.mxu0
      %v1353 = vpop.f32.mrf.mxu0
      %v1354 = vadd.f32 %v1025, %v1353
      %v1355 = vpop.f32.mrf.mxu0
      %1356 = vmatprep.mubr.bf16.mxu0 0
      %1357 = vmatmul.mubr.bf16.gmra.mxu0 %v1119
      %v1358 = vpop.f32.mrf.mxu0
      %v1359 = vadd.f32 %v1025, %v1358
      %v1360 = vpop.f32.mrf.mxu0
      %v1361 = vpop.f32.mrf.mxu0
      %v1362 = vadd.f32 %v1025, %v1361
      %v1363 = vpop.f32.mrf.mxu0
      %1364 = vmatprep.mubr.bf16.mxu0 0
      %1365 = vmatmul.mubr.bf16.gmra.mxu0 %v1122
      %v1366 = vpop.f32.mrf.mxu0
      %v1367 = vadd.f32 %v1025, %v1366
      %v1368 = vpop.f32.mrf.mxu0
      %v1369 = vpop.f32.mrf.mxu0
      %v1370 = vadd.f32 %v1025, %v1369
      %v1371 = vpop.f32.mrf.mxu0
      %1372 = vmatprep.mubr.bf16.mxu0 0
      %1373 = vmatmul.mubr.bf16.gmra.mxu0 %v1125
      %v1374 = vpop.f32.mrf.mxu0
      %v1375 = vadd.f32 %v1025, %v1374
      %v1376 = vpop.f32.mrf.mxu0
      %v1377 = vpop.f32.mrf.mxu0
      %v1378 = vadd.f32 %v1025, %v1377
      %v1379 = vpop.f32.mrf.mxu0
      %1380 = vmatprep.mubr.bf16.mxu0 0
      %1381 = vmatmul.mubr.bf16.gmra.mxu0 %v1128
      %v1382 = vpop.f32.mrf.mxu0
      %v1383 = vadd.f32 %v1025, %v1382
      %v1384 = vpop.f32.mrf.mxu0
      %v1385 = vpop.f32.mrf.mxu0
      %v1386 = vadd.f32 %v1025, %v1385
      %v1387 = vpop.f32.mrf.mxu0
      %1388 = vmatprep.mubr.bf16.mxu0 0
      %1389 = vmatmul.mubr.bf16.gmra.mxu0 %v1131
      %v1390 = vpop.f32.mrf.mxu0
      %v1391 = vadd.f32 %v1025, %v1390
      %v1392 = vpop.f32.mrf.mxu0
      %v1393 = vpop.f32.mrf.mxu0
      %v1394 = vadd.f32 %v1025, %v1393
      %v1395 = vpop.f32.mrf.mxu0
      %1396 = vmatprep.mubr.bf16.mxu0 0
      %1397 = vmatmul.mubr.bf16.gmra.mxu0 %v1134
      %v1398 = vpop.f32.mrf.mxu0
      %v1399 = vadd.f32 %v1025, %v1398
      %v1400 = vpop.f32.mrf.mxu0
      %v1401 = vpop.f32.mrf.mxu0
      %v1402 = vadd.f32 %v1025, %v1401
      %v1403 = vpop.f32.mrf.mxu0
      %1404 = vmatprep.mubr.bf16.mxu0 0
      %1405 = vmatmul.mubr.bf16.gmra.mxu0 %v1137
      %v1406 = vpop.f32.mrf.mxu0
      %v1407 = vadd.f32 %v1025, %v1406
      %v1408 = vpop.f32.mrf.mxu0
      %v1409 = vpop.f32.mrf.mxu0
      %v1410 = vadd.f32 %v1025, %v1409
      %v1411 = vpop.f32.mrf.mxu0
      %1412 = vmatprep.mubr.bf16.mxu0 0
      %1413 = vmatmul.mubr.bf16.gmra.mxu0 %v1140
      %v1414 = vpop.f32.mrf.mxu0
      %v1415 = vadd.f32 %v1025, %v1414
      %v1416 = vpop.f32.mrf.mxu0
      %v1417 = vpop.f32.mrf.mxu0
      %v1418 = vadd.f32 %v1025, %v1417
      %v1419 = vpop.f32.mrf.mxu0
      %1420 = vmatprep.mubr.bf16.mxu0 0
      %1421 = vmatmul.mubr.bf16.gmra.mxu0 %v1143
      %v1422 = vpop.f32.mrf.mxu0
      %v1423 = vadd.f32 %v1025, %v1422
      %v1424 = vpop.f32.mrf.mxu0
      %v1425 = vpop.f32.mrf.mxu0
      %v1426 = vadd.f32 %v1025, %v1425
      %v1427 = vpop.f32.mrf.mxu0
      %1428 = vmatprep.mubr.bf16.mxu0 0
      %1429 = vmatmul.mubr.bf16.gmra.mxu0 %v1146
      %v1430 = vpop.f32.mrf.mxu0
      %v1431 = vadd.f32 %v1025, %v1430
      %v1432 = vpop.f32.mrf.mxu0
      %v1433 = vpop.f32.mrf.mxu0
      %v1434 = vadd.f32 %v1025, %v1433
      %v1435 = vpop.f32.mrf.mxu0
      %1436 = vdwg.mxu0
      %v1437 = vmax.f32 %v1183, 0.0
      %v1438 = vmax.f32 %v1186, 0.0
      %v1439 = vmax.f32 %v1191, 0.0
      %v1440 = vmax.f32 %v1194, 0.0
      %v1441 = vmax.f32 %v1199, 0.0
      %v1442 = vmax.f32 %v1202, 0.0
      %v1443 = vmax.f32 %v1207, 0.0
      %v1444 = vmax.f32 %v1210, 0.0
      %v1445 = vmax.f32 %v1215, 0.0
      %v1446 = vmax.f32 %v1218, 0.0
      %v1447 = vmax.f32 %v1223, 0.0
      %v1448 = vmax.f32 %v1226, 0.0
      %v1449 = vmax.f32 %v1231, 0.0
      %v1450 = vmax.f32 %v1234, 0.0
      %v1451 = vmax.f32 %v1239, 0.0
      %v1452 = vmax.f32 %v1242, 0.0
      %v1453 = vmax.f32 %v1247, 0.0
      %v1454 = vmax.f32 %v1250, 0.0
      %v1455 = vmax.f32 %v1255, 0.0
      %v1456 = vmax.f32 %v1258, 0.0
      %v1457 = vmax.f32 %v1263, 0.0
      %v1458 = vmax.f32 %v1266, 0.0
      %v1459 = vmax.f32 %v1271, 0.0
      %v1460 = vmax.f32 %v1274, 0.0
      %v1461 = vmax.f32 %v1279, 0.0
      %v1462 = vmax.f32 %v1282, 0.0
      %v1463 = vmax.f32 %v1287, 0.0
      %v1464 = vmax.f32 %v1290, 0.0
      %v1465 = vmax.f32 %v1295, 0.0
      %v1466 = vmax.f32 %v1298, 0.0
      %v1467 = vmax.f32 %v1303, 0.0
      %v1468 = vmax.f32 %v1306, 0.0
      %v1469 = vmax.f32 %v1311, 0.0
      %v1470 = vmax.f32 %v1314, 0.0
      %v1471 = vmax.f32 %v1319, 0.0
      %v1472 = vmax.f32 %v1322, 0.0
      %v1473 = vmax.f32 %v1327, 0.0
      %v1474 = vmax.f32 %v1330, 0.0
      %v1475 = vmax.f32 %v1335, 0.0
      %v1476 = vmax.f32 %v1338, 0.0
      %v1477 = vmax.f32 %v1343, 0.0
      %v1478 = vmax.f32 %v1346, 0.0
      %v1479 = vmax.f32 %v1351, 0.0
      %v1480 = vmax.f32 %v1354, 0.0
      %v1481 = vmax.f32 %v1359, 0.0
      %v1482 = vmax.f32 %v1362, 0.0
      %v1483 = vmax.f32 %v1367, 0.0
      %v1484 = vmax.f32 %v1370, 0.0
      %v1485 = vmax.f32 %v1375, 0.0
      %v1486 = vmax.f32 %v1378, 0.0
      %v1487 = vmax.f32 %v1383, 0.0
      %v1488 = vmax.f32 %v1386, 0.0
      %v1489 = vmax.f32 %v1391, 0.0
      %v1490 = vmax.f32 %v1394, 0.0
      %v1491 = vmax.f32 %v1399, 0.0
      %v1492 = vmax.f32 %v1402, 0.0
      %v1493 = vmax.f32 %v1407, 0.0
      %v1494 = vmax.f32 %v1410, 0.0
      %v1495 = vmax.f32 %v1415, 0.0
      %v1496 = vmax.f32 %v1418, 0.0
      %v1497 = vmax.f32 %v1423, 0.0
      %v1498 = vmax.f32 %v1426, 0.0
      %v1499 = vmax.f32 %v1431, 0.0
      %v1500 = vmax.f32 %v1434, 0.0
      %v1501 = vpack.c.bf16 %v1438, %v1437
      %v1502 = vpack.c.bf16 %v1440, %v1439
      %v1503 = vpack.c.bf16 %v1442, %v1441
      %v1504 = vpack.c.bf16 %v1444, %v1443
      %v1505 = vpack.c.bf16 %v1446, %v1445
      %v1506 = vpack.c.bf16 %v1448, %v1447
      %v1507 = vpack.c.bf16 %v1450, %v1449
      %v1508 = vpack.c.bf16 %v1452, %v1451
      %v1509 = vpack.c.bf16 %v1454, %v1453
      %v1510 = vpack.c.bf16 %v1456, %v1455
      %v1511 = vpack.c.bf16 %v1458, %v1457
      %v1512 = vpack.c.bf16 %v1460, %v1459
      %v1513 = vpack.c.bf16 %v1462, %v1461
      %v1514 = vpack.c.bf16 %v1464, %v1463
      %v1515 = vpack.c.bf16 %v1466, %v1465
      %v1516 = vpack.c.bf16 %v1468, %v1467
      %v1517 = vpack.c.bf16 %v1470, %v1469
      %v1518 = vpack.c.bf16 %v1472, %v1471
      %v1519 = vpack.c.bf16 %v1474, %v1473
      %v1520 = vpack.c.bf16 %v1476, %v1475
      %v1521 = vpack.c.bf16 %v1478, %v1477
      %v1522 = vpack.c.bf16 %v1480, %v1479
      %v1523 = vpack.c.bf16 %v1482, %v1481
      %v1524 = vpack.c.bf16 %v1484, %v1483
      %v1525 = vpack.c.bf16 %v1486, %v1485
      %v1526 = vpack.c.bf16 %v1488, %v1487
      %v1527 = vpack.c.bf16 %v1490, %v1489
      %v1528 = vpack.c.bf16 %v1492, %v1491
      %v1529 = vpack.c.bf16 %v1494, %v1493
      %v1530 = vpack.c.bf16 %v1496, %v1495
      %v1531 = vpack.c.bf16 %v1498, %v1497
      %v1532 = vpack.c.bf16 %v1500, %v1499
      %v1533 = vld [vmem:[%s5] sm:$0xf]
      %v1534 = vld [vmem:[%s5 + $0x4] sm:$0xf]
      %v1535 = vld [vmem:[%s5 + $0x8] sm:$0xf]
      %v1536 = vld [vmem:[%s5 + $0xc] sm:$0xf]
      %v1537 = vld [vmem:[%s5 + $0x10] sm:$0xf]
      %v1538 = vld [vmem:[%s5 + $0x14] sm:$0xf]
      %v1539 = vld [vmem:[%s5 + $0x18] sm:$0xf]
      %v1540 = vld [vmem:[%s5 + $0x1c] sm:$0xf]
      %v1541 = vld [vmem:[%s6] sm:$0x1]
      %v1543 = vlaneseq
      %v1544 = vshrl.u32 %v1543, 7
      %v1545 = vsub.s32 0, %v1544
      %v1546 = vrot.slane %v1541, %v1545
      %v1556 = vunpack.c.l.b16 %v1533
      %v1557 = vunpack.c.l.b16 %v1534
      %v1558 = vunpack.c.l.b16 %v1535
      %v1559 = vunpack.c.l.b16 %v1536
      %v1560 = vunpack.c.l.b16 %v1537
      %v1561 = vunpack.c.l.b16 %v1538
      %v1562 = vunpack.c.l.b16 %v1539
      %v1563 = vunpack.c.l.b16 %v1540
      %v1564 = vpack.c.b16 %v1557, %v1556
      %v1565 = vpack.c.b16 %v1559, %v1558
      %v1566 = vpack.c.b16 %v1561, %v1560
      %v1567 = vpack.c.b16 %v1563, %v1562
      %v1573 = vsel %vm1051, %v1501, 0
      %v1576 = vsel %vm1051, %v1502, 0
      %v1579 = vsel %vm1051, %v1503, 0
      %v1582 = vsel %vm1051, %v1504, 0
      %v1585 = vsel %vm1051, %v1505, 0
      %v1588 = vsel %vm1051, %v1506, 0
      %v1591 = vsel %vm1051, %v1507, 0
      %v1594 = vsel %vm1051, %v1508, 0
      %v1597 = vsel %vm1051, %v1509, 0
      %v1600 = vsel %vm1051, %v1510, 0
      %v1603 = vsel %vm1051, %v1511, 0
      %v1606 = vsel %vm1051, %v1512, 0
      %v1609 = vsel %vm1051, %v1513, 0
      %v1612 = vsel %vm1051, %v1514, 0
      %v1615 = vsel %vm1051, %v1515, 0
      %v1618 = vsel %vm1051, %v1516, 0
      %v1621 = vsel %vm1051, %v1517, 0
      %v1624 = vsel %vm1051, %v1518, 0
      %v1627 = vsel %vm1051, %v1519, 0
      %v1630 = vsel %vm1051, %v1520, 0
      %v1633 = vsel %vm1051, %v1521, 0
      %v1636 = vsel %vm1051, %v1522, 0
      %v1639 = vsel %vm1051, %v1523, 0
      %v1642 = vsel %vm1051, %v1524, 0
      %v1645 = vsel %vm1051, %v1525, 0
      %v1648 = vsel %vm1051, %v1526, 0
      %v1651 = vsel %vm1051, %v1527, 0
      %v1654 = vsel %vm1051, %v1528, 0
      %v1657 = vsel %vm1051, %v1529, 0
      %v1660 = vsel %vm1051, %v1530, 0
      %v1663 = vsel %vm1051, %v1531, 0
      %v1666 = vsel %vm1051, %v1532, 0
      %1668 = vmatprep.subr.bf16.mxu0 0
      %1669 = vmatpush1.bf16.msra.mxu0 0
      %1670 = vmatprep.subr.bf16.mxu0 0
      %1671 = vmatpush1.bf16.msra.mxu0 0
      %1672 = vmatprep.subr.bf16.mxu0 0
      %1673 = vmatpush1.bf16.msra.mxu0 0
      %1674 = vmatprep.subr.bf16.mxu0 0
      %1675 = vmatpush1.bf16.msra.mxu0 0
      %1676 = vmatprep.subr.bf16.mxu0 0
      %1677 = vmatpush1.bf16.msra.mxu0 %v1567
      %1678 = vmatprep.subr.bf16.mxu0 0
      %1679 = vmatpush1.bf16.msra.mxu0 %v1566
      %1680 = vmatprep.subr.bf16.mxu0 0
      %1681 = vmatpush1.bf16.msra.mxu0 %v1565
      %1682 = vmatprep.subr.bf16.mxu0 0
      %1683 = vmatpush1.bf16.msra.mxu0 %v1564
      %1684 = vmatprep.subr.bf16.mxu0 0
      %1685 = vmatpush2.bf16.msra.mxu0 0
      %1686 = vmatprep.subr.bf16.mxu0 0
      %1687 = vmatpush2.bf16.msra.mxu0 0
      %1688 = vmatprep.subr.bf16.mxu0 0
      %1689 = vmatpush2.bf16.msra.mxu0 0
      %1690 = vmatprep.subr.bf16.mxu0 0
      %1691 = vmatpush2.bf16.msra.mxu0 0
      %1692 = vmatprep.subr.bf16.mxu0 0
      %1693 = vmatpush2.bf16.msra.mxu0 0
      %1694 = vmatprep.subr.bf16.mxu0 0
      %1695 = vmatpush2.bf16.msra.mxu0 0
      %1696 = vmatprep.subr.bf16.mxu0 0
      %1697 = vmatpush2.bf16.msra.mxu0 0
      %1698 = vmatprep.subr.bf16.mxu0 0
      %1699 = vmatpush2.bf16.msra.mxu0 0
      %1700 = vmatprep.mubr.bf16.mxu0 0
      %1701 = vmatmul.mubr.bf16.gmra.mxu0 %v1573
      %v1702 = vpop.f32.mrf.mxu0
      %v1703 = vadd.f32 %v1546, %v1702
      %v1704 = vpop.f32.mrf.mxu0
      %v1705 = vpop.f32.mrf.mxu0
      %v1706 = vadd.f32 %v1546, %v1705
      %v1707 = vpop.f32.mrf.mxu0
      %1708 = vmatprep.mubr.bf16.mxu0 0
      %1709 = vmatmul.mubr.bf16.gmra.mxu0 %v1576
      %v1710 = vpop.f32.mrf.mxu0
      %v1711 = vadd.f32 %v1546, %v1710
      %v1712 = vpop.f32.mrf.mxu0
      %v1713 = vpop.f32.mrf.mxu0
      %v1714 = vadd.f32 %v1546, %v1713
      %v1715 = vpop.f32.mrf.mxu0
      %1716 = vmatprep.mubr.bf16.mxu0 0
      %1717 = vmatmul.mubr.bf16.gmra.mxu0 %v1579
      %v1718 = vpop.f32.mrf.mxu0
      %v1719 = vadd.f32 %v1546, %v1718
      %v1720 = vpop.f32.mrf.mxu0
      %v1721 = vpop.f32.mrf.mxu0
      %v1722 = vadd.f32 %v1546, %v1721
      %v1723 = vpop.f32.mrf.mxu0
      %1724 = vmatprep.mubr.bf16.mxu0 0
      %1725 = vmatmul.mubr.bf16.gmra.mxu0 %v1582
      %v1726 = vpop.f32.mrf.mxu0
      %v1727 = vadd.f32 %v1546, %v1726
      %v1728 = vpop.f32.mrf.mxu0
      %v1729 = vpop.f32.mrf.mxu0
      %v1730 = vadd.f32 %v1546, %v1729
      %v1731 = vpop.f32.mrf.mxu0
      %1732 = vmatprep.mubr.bf16.mxu0 0
      %1733 = vmatmul.mubr.bf16.gmra.mxu0 %v1585
      %v1734 = vpop.f32.mrf.mxu0
      %v1735 = vadd.f32 %v1546, %v1734
      %v1736 = vpop.f32.mrf.mxu0
      %v1737 = vpop.f32.mrf.mxu0
      %v1738 = vadd.f32 %v1546, %v1737
      %v1739 = vpop.f32.mrf.mxu0
      %1740 = vmatprep.mubr.bf16.mxu0 0
      %1741 = vmatmul.mubr.bf16.gmra.mxu0 %v1588
      %v1742 = vpop.f32.mrf.mxu0
      %v1743 = vadd.f32 %v1546, %v1742
      %v1744 = vpop.f32.mrf.mxu0
      %v1745 = vpop.f32.mrf.mxu0
      %v1746 = vadd.f32 %v1546, %v1745
      %v1747 = vpop.f32.mrf.mxu0
      %1748 = vmatprep.mubr.bf16.mxu0 0
      %1749 = vmatmul.mubr.bf16.gmra.mxu0 %v1591
      %v1750 = vpop.f32.mrf.mxu0
      %v1751 = vadd.f32 %v1546, %v1750
      %v1752 = vpop.f32.mrf.mxu0
      %v1753 = vpop.f32.mrf.mxu0
      %v1754 = vadd.f32 %v1546, %v1753
      %v1755 = vpop.f32.mrf.mxu0
      %1756 = vmatprep.mubr.bf16.mxu0 0
      %1757 = vmatmul.mubr.bf16.gmra.mxu0 %v1594
      %v1758 = vpop.f32.mrf.mxu0
      %v1759 = vadd.f32 %v1546, %v1758
      %v1760 = vpop.f32.mrf.mxu0
      %v1761 = vpop.f32.mrf.mxu0
      %v1762 = vadd.f32 %v1546, %v1761
      %v1763 = vpop.f32.mrf.mxu0
      %1764 = vmatprep.mubr.bf16.mxu0 0
      %1765 = vmatmul.mubr.bf16.gmra.mxu0 %v1597
      %v1766 = vpop.f32.mrf.mxu0
      %v1767 = vadd.f32 %v1546, %v1766
      %v1768 = vpop.f32.mrf.mxu0
      %v1769 = vpop.f32.mrf.mxu0
      %v1770 = vadd.f32 %v1546, %v1769
      %v1771 = vpop.f32.mrf.mxu0
      %1772 = vmatprep.mubr.bf16.mxu0 0
      %1773 = vmatmul.mubr.bf16.gmra.mxu0 %v1600
      %v1774 = vpop.f32.mrf.mxu0
      %v1775 = vadd.f32 %v1546, %v1774
      %v1776 = vpop.f32.mrf.mxu0
      %v1777 = vpop.f32.mrf.mxu0
      %v1778 = vadd.f32 %v1546, %v1777
      %v1779 = vpop.f32.mrf.mxu0
      %1780 = vmatprep.mubr.bf16.mxu0 0
      %1781 = vmatmul.mubr.bf16.gmra.mxu0 %v1603
      %v1782 = vpop.f32.mrf.mxu0
      %v1783 = vadd.f32 %v1546, %v1782
      %v1784 = vpop.f32.mrf.mxu0
      %v1785 = vpop.f32.mrf.mxu0
      %v1786 = vadd.f32 %v1546, %v1785
      %v1787 = vpop.f32.mrf.mxu0
      %1788 = vmatprep.mubr.bf16.mxu0 0
      %1789 = vmatmul.mubr.bf16.gmra.mxu0 %v1606
      %v1790 = vpop.f32.mrf.mxu0
      %v1791 = vadd.f32 %v1546, %v1790
      %v1792 = vpop.f32.mrf.mxu0
      %v1793 = vpop.f32.mrf.mxu0
      %v1794 = vadd.f32 %v1546, %v1793
      %v1795 = vpop.f32.mrf.mxu0
      %1796 = vmatprep.mubr.bf16.mxu0 0
      %1797 = vmatmul.mubr.bf16.gmra.mxu0 %v1609
      %v1798 = vpop.f32.mrf.mxu0
      %v1799 = vadd.f32 %v1546, %v1798
      %v1800 = vpop.f32.mrf.mxu0
      %v1801 = vpop.f32.mrf.mxu0
      %v1802 = vadd.f32 %v1546, %v1801
      %v1803 = vpop.f32.mrf.mxu0
      %1804 = vmatprep.mubr.bf16.mxu0 0
      %1805 = vmatmul.mubr.bf16.gmra.mxu0 %v1612
      %v1806 = vpop.f32.mrf.mxu0
      %v1807 = vadd.f32 %v1546, %v1806
      %v1808 = vpop.f32.mrf.mxu0
      %v1809 = vpop.f32.mrf.mxu0
      %v1810 = vadd.f32 %v1546, %v1809
      %v1811 = vpop.f32.mrf.mxu0
      %1812 = vmatprep.mubr.bf16.mxu0 0
      %1813 = vmatmul.mubr.bf16.gmra.mxu0 %v1615
      %v1814 = vpop.f32.mrf.mxu0
      %v1815 = vadd.f32 %v1546, %v1814
      %v1816 = vpop.f32.mrf.mxu0
      %v1817 = vpop.f32.mrf.mxu0
      %v1818 = vadd.f32 %v1546, %v1817
      %v1819 = vpop.f32.mrf.mxu0
      %1820 = vmatprep.mubr.bf16.mxu0 0
      %1821 = vmatmul.mubr.bf16.gmra.mxu0 %v1618
      %v1822 = vpop.f32.mrf.mxu0
      %v1823 = vadd.f32 %v1546, %v1822
      %v1824 = vpop.f32.mrf.mxu0
      %v1825 = vpop.f32.mrf.mxu0
      %v1826 = vadd.f32 %v1546, %v1825
      %v1827 = vpop.f32.mrf.mxu0
      %1828 = vmatprep.mubr.bf16.mxu0 0
      %1829 = vmatmul.mubr.bf16.gmra.mxu0 %v1621
      %v1830 = vpop.f32.mrf.mxu0
      %v1831 = vadd.f32 %v1546, %v1830
      %v1832 = vpop.f32.mrf.mxu0
      %v1833 = vpop.f32.mrf.mxu0
      %v1834 = vadd.f32 %v1546, %v1833
      %v1835 = vpop.f32.mrf.mxu0
      %1836 = vmatprep.mubr.bf16.mxu0 0
      %1837 = vmatmul.mubr.bf16.gmra.mxu0 %v1624
      %v1838 = vpop.f32.mrf.mxu0
      %v1839 = vadd.f32 %v1546, %v1838
      %v1840 = vpop.f32.mrf.mxu0
      %v1841 = vpop.f32.mrf.mxu0
      %v1842 = vadd.f32 %v1546, %v1841
      %v1843 = vpop.f32.mrf.mxu0
      %1844 = vmatprep.mubr.bf16.mxu0 0
      %1845 = vmatmul.mubr.bf16.gmra.mxu0 %v1627
      %v1846 = vpop.f32.mrf.mxu0
      %v1847 = vadd.f32 %v1546, %v1846
      %v1848 = vpop.f32.mrf.mxu0
      %v1849 = vpop.f32.mrf.mxu0
      %v1850 = vadd.f32 %v1546, %v1849
      %v1851 = vpop.f32.mrf.mxu0
      %1852 = vmatprep.mubr.bf16.mxu0 0
      %1853 = vmatmul.mubr.bf16.gmra.mxu0 %v1630
      %v1854 = vpop.f32.mrf.mxu0
      %v1855 = vadd.f32 %v1546, %v1854
      %v1856 = vpop.f32.mrf.mxu0
      %v1857 = vpop.f32.mrf.mxu0
      %v1858 = vadd.f32 %v1546, %v1857
      %v1859 = vpop.f32.mrf.mxu0
      %1860 = vmatprep.mubr.bf16.mxu0 0
      %1861 = vmatmul.mubr.bf16.gmra.mxu0 %v1633
      %v1862 = vpop.f32.mrf.mxu0
      %v1863 = vadd.f32 %v1546, %v1862
      %v1864 = vpop.f32.mrf.mxu0
      %v1865 = vpop.f32.mrf.mxu0
      %v1866 = vadd.f32 %v1546, %v1865
      %v1867 = vpop.f32.mrf.mxu0
      %1868 = vmatprep.mubr.bf16.mxu0 0
      %1869 = vmatmul.mubr.bf16.gmra.mxu0 %v1636
      %v1870 = vpop.f32.mrf.mxu0
      %v1871 = vadd.f32 %v1546, %v1870
      %v1872 = vpop.f32.mrf.mxu0
      %v1873 = vpop.f32.mrf.mxu0
      %v1874 = vadd.f32 %v1546, %v1873
      %v1875 = vpop.f32.mrf.mxu0
      %1876 = vmatprep.mubr.bf16.mxu0 0
      %1877 = vmatmul.mubr.bf16.gmra.mxu0 %v1639
      %v1878 = vpop.f32.mrf.mxu0
      %v1879 = vadd.f32 %v1546, %v1878
      %v1880 = vpop.f32.mrf.mxu0
      %v1881 = vpop.f32.mrf.mxu0
      %v1882 = vadd.f32 %v1546, %v1881
      %v1883 = vpop.f32.mrf.mxu0
      %1884 = vmatprep.mubr.bf16.mxu0 0
      %1885 = vmatmul.mubr.bf16.gmra.mxu0 %v1642
      %v1886 = vpop.f32.mrf.mxu0
      %v1887 = vadd.f32 %v1546, %v1886
      %v1888 = vpop.f32.mrf.mxu0
      %v1889 = vpop.f32.mrf.mxu0
      %v1890 = vadd.f32 %v1546, %v1889
      %v1891 = vpop.f32.mrf.mxu0
      %1892 = vmatprep.mubr.bf16.mxu0 0
      %1893 = vmatmul.mubr.bf16.gmra.mxu0 %v1645
      %v1894 = vpop.f32.mrf.mxu0
      %v1895 = vadd.f32 %v1546, %v1894
      %v1896 = vpop.f32.mrf.mxu0
      %v1897 = vpop.f32.mrf.mxu0
      %v1898 = vadd.f32 %v1546, %v1897
      %v1899 = vpop.f32.mrf.mxu0
      %1900 = vmatprep.mubr.bf16.mxu0 0
      %1901 = vmatmul.mubr.bf16.gmra.mxu0 %v1648
      %v1902 = vpop.f32.mrf.mxu0
      %v1903 = vadd.f32 %v1546, %v1902
      %v1904 = vpop.f32.mrf.mxu0
      %v1905 = vpop.f32.mrf.mxu0
      %v1906 = vadd.f32 %v1546, %v1905
      %v1907 = vpop.f32.mrf.mxu0
      %1908 = vmatprep.mubr.bf16.mxu0 0
      %1909 = vmatmul.mubr.bf16.gmra.mxu0 %v1651
      %v1910 = vpop.f32.mrf.mxu0
      %v1911 = vadd.f32 %v1546, %v1910
      %v1912 = vpop.f32.mrf.mxu0
      %v1913 = vpop.f32.mrf.mxu0
      %v1914 = vadd.f32 %v1546, %v1913
      %v1915 = vpop.f32.mrf.mxu0
      %1916 = vmatprep.mubr.bf16.mxu0 0
      %1917 = vmatmul.mubr.bf16.gmra.mxu0 %v1654
      %v1918 = vpop.f32.mrf.mxu0
      %v1919 = vadd.f32 %v1546, %v1918
      %v1920 = vpop.f32.mrf.mxu0
      %v1921 = vpop.f32.mrf.mxu0
      %v1922 = vadd.f32 %v1546, %v1921
      %v1923 = vpop.f32.mrf.mxu0
      %1924 = vmatprep.mubr.bf16.mxu0 0
      %1925 = vmatmul.mubr.bf16.gmra.mxu0 %v1657
      %v1926 = vpop.f32.mrf.mxu0
      %v1927 = vadd.f32 %v1546, %v1926
      %v1928 = vpop.f32.mrf.mxu0
      %v1929 = vpop.f32.mrf.mxu0
      %v1930 = vadd.f32 %v1546, %v1929
      %v1931 = vpop.f32.mrf.mxu0
      %1932 = vmatprep.mubr.bf16.mxu0 0
      %1933 = vmatmul.mubr.bf16.gmra.mxu0 %v1660
      %v1934 = vpop.f32.mrf.mxu0
      %v1935 = vadd.f32 %v1546, %v1934
      %v1936 = vpop.f32.mrf.mxu0
      %v1937 = vpop.f32.mrf.mxu0
      %v1938 = vadd.f32 %v1546, %v1937
      %v1939 = vpop.f32.mrf.mxu0
      %1940 = vmatprep.mubr.bf16.mxu0 0
      %1941 = vmatmul.mubr.bf16.gmra.mxu0 %v1663
      %v1942 = vpop.f32.mrf.mxu0
      %v1943 = vadd.f32 %v1546, %v1942
      %v1944 = vpop.f32.mrf.mxu0
      %v1945 = vpop.f32.mrf.mxu0
      %v1946 = vadd.f32 %v1546, %v1945
      %v1947 = vpop.f32.mrf.mxu0
      %1948 = vmatprep.mubr.bf16.mxu0 0
      %1949 = vmatmul.mubr.bf16.gmra.mxu0 %v1666
      %v1950 = vpop.f32.mrf.mxu0
      %v1951 = vadd.f32 %v1546, %v1950
      %v1952 = vpop.f32.mrf.mxu0
      %v1953 = vpop.f32.mrf.mxu0
      %v1954 = vadd.f32 %v1546, %v1953
      %v1955 = vpop.f32.mrf.mxu0
      %1956 = vdwg.mxu0
      %1957 = vst [vmem:[%s280] sm:$0xff] %v1703
      %1958 = vst [vmem:[%s280 + $0x8] sm:$0xff] %v1706
      %1959 = vst [vmem:[%s280 + $0x10] sm:$0xff] %v1711
      %1960 = vst [vmem:[%s280 + $0x18] sm:$0xff] %v1714
      %1961 = vst [vmem:[%s280 + $0x20] sm:$0xff] %v1719
      %1962 = vst [vmem:[%s280 + $0x28] sm:$0xff] %v1722
      %1963 = vst [vmem:[%s280 + $0x30] sm:$0xff] %v1727
      %1964 = vst [vmem:[%s280 + $0x38] sm:$0xff] %v1730
      %1965 = vst [vmem:[%s280 + $0x40] sm:$0xff] %v1735
      %1966 = vst [vmem:[%s280 + $0x48] sm:$0xff] %v1738
      %1967 = vst [vmem:[%s280 + $0x50] sm:$0xff] %v1743
      %1968 = vst [vmem:[%s280 + $0x58] sm:$0xff] %v1746
      %1969 = vst [vmem:[%s280 + $0x60] sm:$0xff] %v1751
      %1970 = vst [vmem:[%s280 + $0x68] sm:$0xff] %v1754
      %1971 = vst [vmem:[%s280 + $0x70] sm:$0xff] %v1759
      %1972 = vst [vmem:[%s280 + $0x78] sm:$0xff] %v1762
      %1973 = vst [vmem:[%s280 + $0x80] sm:$0xff] %v1767
      %1974 = vst [vmem:[%s280 + $0x88] sm:$0xff] %v1770
      %1975 = vst [vmem:[%s280 + $0x90] sm:$0xff] %v1775
      %1976 = vst [vmem:[%s280 + $0x98] sm:$0xff] %v1778
      %1977 = vst [vmem:[%s280 + $0xa0] sm:$0xff] %v1783
      %1978 = vst [vmem:[%s280 + $0xa8] sm:$0xff] %v1786
      %1979 = vst [vmem:[%s280 + $0xb0] sm:$0xff] %v1791
      %1980 = vst [vmem:[%s280 + $0xb8] sm:$0xff] %v1794
      %1981 = vst [vmem:[%s280 + $0xc0] sm:$0xff] %v1799
      %1982 = vst [vmem:[%s280 + $0xc8] sm:$0xff] %v1802
      %1983 = vst [vmem:[%s280 + $0xd0] sm:$0xff] %v1807
      %1984 = vst [vmem:[%s280 + $0xd8] sm:$0xff] %v1810
      %1985 = vst [vmem:[%s280 + $0xe0] sm:$0xff] %v1815
      %1986 = vst [vmem:[%s280 + $0xe8] sm:$0xff] %v1818
      %1987 = vst [vmem:[%s280 + $0xf0] sm:$0xff] %v1823
      %1988 = vst [vmem:[%s280 + $0xf8] sm:$0xff] %v1826
      %1989 = vst [vmem:[%s280 + $0x100] sm:$0xff] %v1831
      %1990 = vst [vmem:[%s280 + $0x108] sm:$0xff] %v1834
      %1991 = vst [vmem:[%s280 + $0x110] sm:$0xff] %v1839
      %1992 = vst [vmem:[%s280 + $0x118] sm:$0xff] %v1842
      %1993 = vst [vmem:[%s280 + $0x120] sm:$0xff] %v1847
      %1994 = vst [vmem:[%s280 + $0x128] sm:$0xff] %v1850
      %1995 = vst [vmem:[%s280 + $0x130] sm:$0xff] %v1855
      %1996 = vst [vmem:[%s280 + $0x138] sm:$0xff] %v1858
      %1997 = vst [vmem:[%s280 + $0x140] sm:$0xff] %v1863
      %1998 = vst [vmem:[%s280 + $0x148] sm:$0xff] %v1866
      %1999 = vst [vmem:[%s280 + $0x150] sm:$0xff] %v1871
      %2000 = vst [vmem:[%s280 + $0x158] sm:$0xff] %v1874
      %2001 = vst [vmem:[%s280 + $0x160] sm:$0xff] %v1879
      %2002 = vst [vmem:[%s280 + $0x168] sm:$0xff] %v1882
      %2003 = vst [vmem:[%s280 + $0x170] sm:$0xff] %v1887
      %2004 = vst [vmem:[%s280 + $0x178] sm:$0xff] %v1890
      %2005 = vst [vmem:[%s280 + $0x180] sm:$0xff] %v1895
      %2006 = vst [vmem:[%s280 + $0x188] sm:$0xff] %v1898
      %2007 = vst [vmem:[%s280 + $0x190] sm:$0xff] %v1903
      %2008 = vst [vmem:[%s280 + $0x198] sm:$0xff] %v1906
      %2009 = vst [vmem:[%s280 + $0x1a0] sm:$0xff] %v1911
      %2010 = vst [vmem:[%s280 + $0x1a8] sm:$0xff] %v1914
      %2011 = vst [vmem:[%s280 + $0x1b0] sm:$0xff] %v1919
      %2012 = vst [vmem:[%s280 + $0x1b8] sm:$0xff] %v1922
      %2013 = vst [vmem:[%s280 + $0x1c0] sm:$0xff] %v1927
      %2014 = vst [vmem:[%s280 + $0x1c8] sm:$0xff] %v1930
      %2015 = vst [vmem:[%s280 + $0x1d0] sm:$0xff] %v1935
      %2016 = vst [vmem:[%s280 + $0x1d8] sm:$0xff] %v1938
      %2017 = vst [vmem:[%s280 + $0x1e0] sm:$0xff] %v1943
      %2018 = vst [vmem:[%s280 + $0x1e8] sm:$0xff] %v1946
      %2019 = vst [vmem:[%s280 + $0x1f0] sm:$0xff] %v1951
      %2020 = vst [vmem:[%s280 + $0x1f8] sm:$0xff] %v1954
      %s2021 = smul.u32 64, %s18
      %p2022 = scmp.lt.s32.totalorder %s2021, 127
      %s2023 = scalar_select %p2022, %s2021, 127
      %s2024 = smul.addr %s2023, 8
      %s2025 = scalar_lea.vmem %s7, %s2024
      // Predicated region
      $region49: #{mlp_forward.1} parent=47 // pred_check
        %p2026 = pneg %p188
      $region50: #{mlp_forward.1} parent=47 // pred_check_branch
        %2028 = sbr.rel (%p2026) target = $region52
      $region51: #{mlp_forward.1} parent=47 // pred_region
        %s2029 = smul.u32 64, %s18
      $region52: #{mlp_forward.1} parent=47 // pred_fallthru
        _
    $region48: #{mlp_forward.1} parent=5 // pred_fallthru
      _
    %p2030 = scmp.le.s32.totalorder 2, %s13
    // Predicated region
    $region53: #{mlp_forward.1} parent=5 // pred_check
      %p2031 = pneg %p2030
    $region54: #{mlp_forward.1} parent=5 // pred_check_branch
      %2033 = sbr.rel (%p2031) target = $region56
    $region55: #{mlp_forward.1} parent=5 // pred_region
      %s2034 = ssub.s32 %s13, 2
      // Predicated region
      $region57: #{mlp_forward.1} parent=55 // pred_check
        %p2035 = pneg %p194
      $region58: #{mlp_forward.1} parent=55 // pred_check_branch
        %2037 = sbr.rel (%p2035) target = $region60
      $region59: #{mlp_forward.1} parent=55 // pred_region
        %s2038 = smul.u32 64, %s19
        %p2039 = scmp.lt.s32.totalorder %s2038, 127
        %s2040 = scalar_select %p2039, %s2038, 127
        %s2041 = smul.addr %s2040, 8
        %s2042 = scalar_lea.vmem %s7, %s2041
      $region60: #{mlp_forward.1} parent=55 // pred_fallthru
        _
    $region56: #{mlp_forward.1} parent=5 // pred_fallthru
      _
  $region6: #{mlp_forward.1} parent=0 // loop_footer
    %s17 = sadd.s32 1, %s13
  $region7: #{mlp_forward.1} parent=0 // loop_footer_branch
    %12 = sbr.rel target = $region3
  $region8: #{mlp_forward.1} parent=0 // loop_exit
    _

</llo_original>
